<compile_context>
chip_gen: v7x
topology: tpu7x:2x2x1
jax: 0.10.0
libtpu: 0.0.40
codegen_flags: <defaults>
</compile_context>

<pallas_src>
import functools

import jax
import jax.numpy as jnp
from jax.experimental import pallas as pl
from jax.experimental.pallas import tpu as pltpu


def _round_up(x, m):
    return (x + m - 1) // m * m


def _vmem_capacity_bytes():
    try:
        info = pltpu.get_tpu_info()
        cap = getattr(info, "vmem_capacity_bytes", None)
        if cap:
            return int(cap)
    except Exception:
        pass
    return 64 << 20  # conservative fallback (v7x per-core VMEM)


def _attention_kernel(
    temp_ref,     # SMEM (1, 1) f32           : temperature
    x_ref,        # VMEM (TB, C_in, hw_tile)  : TB batch rows, one spatial tile
    fc_w_ref,     # VMEM (C_in, A_pad)
    fc_b_ref,     # VMEM (1, A_pad)
    head_w_ref,   # VMEM (A_pad, C_pad)       : [channel | filter | spatial+kernel]
    head_b_ref,   # VMEM (1, C_pad)
    out_ref,      # VMEM (TB, 1, C_pad)       : fused lane-dense attention outputs
    acc_ref,      # VMEM scratch (TB, C_in, acc_w) f32 : lane-resident partial sums
    *,
    hw_len,       # python int: true H*W
    hw_tile,      # python int: spatial tile width (lanes)
    acc_w,        # python int: accumulator lane width (128, or hw_tile if HW < 128)
    inv_hw,       # python float: 1 / (H*W)
    off_kn,       # python int: lane offset of the kernel-attention logits
    kernel_num,   # python int
    ragged,       # python bool: HW % hw_tile != 0 (last tile has OOB lanes)
):
    hw = pl.program_id(1)

    @pl.when(hw == 0)
    def _init():
        acc_ref[...] = jnp.zeros_like(acc_ref)

    # ---- streaming global-average-pool ------------------------------------
    # Lane-resident partial sums: add each 128-lane group of the tile into the
    # (TB, C_in, acc_w) accumulator with plain VPU adds; the cross-lane reduce
    # happens once at finalize.  OOB lanes of a ragged last tile are masked.
    n_groups = hw_tile // acc_w
    if ragged:
        lane = jax.lax.broadcasted_iota(jnp.int32, (1, 1, acc_w), 2)
        base = hw * hw_tile

    def _load_group(g):
        grp = x_ref[:, :, g * acc_w:(g + 1) * acc_w].astype(jnp.float32)
        if ragged:
            rem = hw_len - base - g * acc_w          # remaining valid lanes
            grp = jnp.where(lane < rem, grp, 0.0)
        return grp

    partial = _load_group(0)
    for g in range(1, n_groups):
        partial = partial + _load_group(g)
    acc_ref[...] += partial

    # ---- finalize: fc + fused attention heads (once per batch block) -------
    @pl.when(hw == pl.num_programs(1) - 1)
    def _finalize():
        pooled = jnp.sum(acc_ref[...], axis=-1) * inv_hw                  # (TB, C_in)

        # fc (1x1 conv on the pooled vector) + ReLU
        hidden = jnp.dot(pooled, fc_w_ref[...],
                         preferred_element_type=jnp.float32) + fc_b_ref[...]
        hidden = jnp.maximum(hidden, 0.0)                                 # (TB, A_pad)

        # One fused MXU matmul for all four heads; divide-by-T folded into a
        # single multiply of the logits.
        inv_t = 1.0 / temp_ref[0, 0]
        logits = (jnp.dot(hidden, head_w_ref[...],
                          preferred_element_type=jnp.float32)
                  + head_b_ref[...]) * inv_t                              # (TB, C_pad)

        # channel / filter / spatial heads: sigmoid.
        sig = jax.nn.sigmoid(logits)

        # kernel head: masked softmax over its kernel_num lanes (exact divide).
        lane2 = jax.lax.broadcasted_iota(jnp.int32, logits.shape, 1)
        in_kn = (lane2 >= off_kn) & (lane2 < off_kn + kernel_num)
        kn_logits = jnp.where(in_kn, logits, jnp.float32(-1e30))
        kn_max = jnp.max(kn_logits, axis=-1, keepdims=True)
        kn_exp = jnp.exp(kn_logits - kn_max)          # non-kn lanes underflow to 0
        kn_sum = jnp.sum(kn_exp, axis=-1, keepdims=True)
        kn_soft = kn_exp / kn_sum

        # Single lane-dense store of the fused output slab.
        out = jnp.where(in_kn, kn_soft, sig)                              # (TB, C_pad)
        out_ref[...] = out[:, None, :]


@functools.partial(jax.jit,
                   static_argnames=("kernel_size", "kernel_num", "max_hw_tile"))
def attention_forward(x, params, temperature, kernel_size, kernel_num,
                      max_hw_tile=None):
    """x: (B, C_in, H, W) (NCHW like PyTorch). Returns the 4 attention tensors.

    Padded lanes of the internal fused output slab hold sigmoid(0)=0.5
    garbage; they are sliced away here and must never be consumed directly.
    """
    B, C_in, H, W = x.shape
    HW = H * W

    fc_w, fc_b, ch_w, ch_b, fl_w, fl_b, sp_w, sp_b, kn_w, kn_b = params
    A = fc_w.shape[1]
    C_out = fl_w.shape[1]
    KK = kernel_size * kernel_size
    KN = kernel_num
    f32 = jnp.float32
    itemsize = jnp.dtype(x.dtype).itemsize

    # ---- lane-dense fused head layout (spatial + kernel share a segment) ---
    A_pad = _round_up(A, 128)
    seg_ch = _round_up(C_in, 128)
    seg_fl = _round_up(C_out, 128)
    seg_tail = _round_up(KK + KN, 128)
    off_fl = seg_ch
    off_sp = seg_ch + seg_fl
    off_kn = off_sp + KK
    C_pad = off_sp + seg_tail

    fc_w_p = jnp.pad(fc_w.astype(f32), ((0, 0), (0, A_pad - A)))
    fc_b_p = jnp.pad(fc_b.astype(f32), ((0, 0), (0, A_pad - A)))

    def _pad_head(w, b, seg):
        n = w.shape[1]
        return (jnp.pad(w.astype(f32), ((0, A_pad - A), (0, seg - n))),
                jnp.pad(b.astype(f32), ((0, 0), (0, seg - n))))

    cw, cb = _pad_head(ch_w, ch_b, seg_ch)
    fw, fb = _pad_head(fl_w, fl_b, seg_fl)
    tw, tb = _pad_head(jnp.concatenate([sp_w, kn_w], axis=1),
                       jnp.concatenate([sp_b, kn_b], axis=1), seg_tail)
    head_w = jnp.concatenate([cw, fw, tw], axis=1)     # (A_pad, C_pad)
    head_b = jnp.concatenate([cb, fb, tb], axis=1)     # (1, C_pad)

    # ---- batch blocking (keep >= 2 parallel blocks for megacore) -----------
    if B >= 16:
        TB = 8
    elif B >= 2:
        TB = B // 2
    else:
        TB = 1
    nb = pl.cdiv(B, TB)

    # ---- spatial tiling of x (streamed, no padded copy) ---------------------
    vmem_cap = _vmem_capacity_bytes()
    hw_rounded = _round_up(HW, 128)
    if HW < 128:
        hw_tile = HW                                   # full-dim exception
    else:
        tile_budget = (2 << 20) if vmem_cap <= (64 << 20) else (4 << 20)
        hw_tile = tile_budget // max(1, TB * C_in * itemsize)
        hw_tile = max(512, min(hw_tile, 8192))
        hw_tile = (hw_tile // 128) * 128
        hw_tile = min(hw_tile, hw_rounded)
        if max_hw_tile is not None:
            hw_tile = min(hw_tile, max(128, (max_hw_tile // 128) * 128))
    num_hw = pl.cdiv(HW, hw_tile)
    ragged = (HW % hw_tile) != 0
    acc_w = 128 if hw_tile % 128 == 0 else hw_tile

    x_flat = x.reshape(B, C_in, HW)                    # view only, no pad copy
    temp_arr = jnp.asarray(temperature, f32).reshape(1, 1)

    # ---- VMEM budget (per-generation cap) -----------------------------------
    x_tile_bytes = TB * C_in * hw_tile * itemsize
    param_bytes = 4 * (C_in * A_pad + A_pad + A_pad * C_pad + C_pad)
    acc_bytes = TB * C_in * acc_w * 4
    out_tile_bytes = TB * C_pad * 4
    need = (2 * x_tile_bytes + 2 * param_bytes + 2 * out_tile_bytes
            + acc_bytes + (8 << 20))                   # + compiler headroom
    vmem_limit = int(min(need, (vmem_cap * 3) // 4))   # <=~48 MiB on v7x

    cost = pl.CostEstimate(
        flops=int(B * C_in * HW + 2 * B * A_pad * (C_in + C_pad)),
        transcendentals=int(B * (C_pad + KN)),
        bytes_accessed=int(B * C_in * HW * itemsize + param_bytes + 4 * B * C_pad),
    )

    kernel = functools.partial(
        _attention_kernel,
        hw_len=HW, hw_tile=hw_tile, acc_w=acc_w, inv_hw=1.0 / HW,
        off_kn=off_kn, kernel_num=KN, ragged=ragged)

    fused = pl.pallas_call(
        kernel,
        out_shape=jax.ShapeDtypeStruct((B, 1, C_pad), f32),
        grid_spec=pltpu.PrefetchScalarGridSpec(
            num_scalar_prefetch=0,
            grid=(nb, num_hw),
            in_specs=[
                pl.BlockSpec(memory_space=pltpu.MemorySpace.SMEM),            # temperature
                pl.BlockSpec((TB, C_in, hw_tile), lambda b, hw: (b, 0, hw)),  # x stream
                pl.BlockSpec((C_in, A_pad), lambda b, hw: (0, 0)),            # resident weights
                pl.BlockSpec((1, A_pad), lambda b, hw: (0, 0)),
                pl.BlockSpec((A_pad, C_pad), lambda b, hw: (0, 0)),
                pl.BlockSpec((1, C_pad), lambda b, hw: (0, 0)),
            ],
            out_specs=pl.BlockSpec((TB, 1, C_pad), lambda b, hw: (b, 0, 0)),
            scratch_shapes=[pltpu.VMEM((TB, C_in, acc_w), jnp.float32)],
        ),
        compiler_params=pltpu.CompilerParams(
            dimension_semantics=("parallel", "arbitrary"),
            vmem_limit_bytes=vmem_limit),
        cost_estimate=cost,
    )(temp_arr, x_flat, fc_w_p, fc_b_p, head_w, head_b)

    fused = fused[:, 0, :]                                                # (B, C_pad)
    channel_attention = fused[:, :C_in].reshape(B, C_in, 1, 1)
    filter_attention = fused[:, off_fl:off_fl + C_out].reshape(B, C_out, 1, 1)
    spatial_attention = fused[:, off_sp:off_sp + KK].reshape(
        B, 1, 1, 1, kernel_size, kernel_size)
    kernel_attention = fused[:, off_kn:off_kn + KN].reshape(B, KN, 1, 1, 1, 1)
    return channel_attention, filter_attention, spatial_attention, kernel_attention


def init_attention_params(key, in_planes, out_planes, kernel_size,
                          reduction=0.0625, kernel_num=4, min_channel=16):
    """Deterministic init matching the PyTorch module's shapes.

    Kaiming-normal (fan_out, relu) for 1x1 conv weights -> std = sqrt(2 / out_ch).
    Biases initialised to 0 (as in _initialize_weights).
    Weights stored pre-transposed as (in_ch, out_ch) for the kernel matmuls.
    """
    attention_channel = max(int(in_planes * reduction), min_channel)
    KK = kernel_size * kernel_size

    def kaiming(k, out_ch, in_ch):
        std = (2.0 / out_ch) ** 0.5
        return (std * jax.random.normal(k, (out_ch, in_ch), jnp.float32)).T

    k1, k2, k3, k4, k5 = jax.random.split(key, 5)
    fc_w = kaiming(k1, attention_channel, in_planes)          # (C_in, A)
    fc_b = jnp.zeros((1, attention_channel), jnp.float32)
    ch_w = kaiming(k2, in_planes, attention_channel)          # (A, C_in)
    ch_b = jnp.zeros((1, in_planes), jnp.float32)
    fl_w = kaiming(k3, out_planes, attention_channel)         # (A, C_out)
    fl_b = jnp.zeros((1, out_planes), jnp.float32)
    sp_w = kaiming(k4, KK, attention_channel)                 # (A, K*K)
    sp_b = jnp.zeros((1, KK), jnp.float32)
    kn_w = kaiming(k5, kernel_num, attention_channel)         # (A, KN)
    kn_b = jnp.zeros((1, kernel_num), jnp.float32)
    return (fc_w, fc_b, ch_w, ch_b, fl_w, fl_b, sp_w, sp_b, kn_w, kn_b)


def attention_reference(x, params, temperature, kernel_size, kernel_num):
    """Pure-JAX reference of the PyTorch Attention forward (general branch)."""
    fc_w, fc_b, ch_w, ch_b, fl_w, fl_b, sp_w, sp_b, kn_w, kn_b = params
    B = x.shape[0]
    pooled = jnp.mean(x.astype(jnp.float32), axis=(2, 3))
    hidden = jnp.maximum(pooled @ fc_w + fc_b, 0.0)
    ch = jax.nn.sigmoid((hidden @ ch_w + ch_b) / temperature)
    fl = jax.nn.sigmoid((hidden @ fl_w + fl_b) / temperature)
    sp = jax.nn.sigmoid((hidden @ sp_w + sp_b) / temperature)
    kn = jax.nn.softmax((hidden @ kn_w + kn_b) / temperature, axis=-1)
    return (ch.reshape(B, -1, 1, 1), fl.reshape(B, -1, 1, 1),
            sp.reshape(B, 1, 1, 1, kernel_size, kernel_size),
            kn.reshape(B, kernel_num, 1, 1, 1, 1))


# TODO(synk): the `skip` branches (in_planes==groups==out_planes, kernel_size==1,
# kernel_num==1) return the python scalar 1.0 in PyTorch; this script implements
# the general (non-skip) configuration, which is the one exercised below.


if __name__ == "__main__":
    # General configuration: groups=1, kernel_size=3, kernel_num=4 -> no skips.
    # B=4 -> TB=2, two parallel batch blocks; H=W=40 -> HW=1600 exercises the
    # masked ragged tail of the un-padded GAP stream.
    in_planes, out_planes, kernel_size, kernel_num = 16, 32, 3, 4
    B, H, W = 4, 40, 40

    key = jax.random.PRNGKey(0)
    k_x, k_p = jax.random.split(key)
    x = jax.random.normal(k_x, (B, in_planes, H, W), jnp.float32)
    params = init_attention_params(k_p, in_planes, out_planes, kernel_size,
                                   kernel_num=kernel_num)

    ch_r, fl_r, sp_r, kn_r = attention_reference(x, params, 1.0, kernel_size,
                                                 kernel_num)

    # Run twice: default tiling (single spatial step) and a forced small tile
    # (multi-step streaming reduction with a masked ragged last tile).
    for max_tile in (None, 512):
        outs = jax.block_until_ready(
            attention_forward(x, params, 1.0, kernel_size, kernel_num,
                              max_hw_tile=max_tile))
        ch, fl, sp, kn = outs

        assert ch.shape == (B, in_planes, 1, 1)
        assert fl.shape == (B, out_planes, 1, 1)
        assert sp.shape == (B, 1, 1, 1, kernel_size, kernel_size)
        assert kn.shape == (B, kernel_num, 1, 1, 1, 1)

        assert jnp.allclose(ch, ch_r, atol=2e-5), "channel attention mismatch"
        assert jnp.allclose(fl, fl_r, atol=2e-5), "filter attention mismatch"
        assert jnp.allclose(sp, sp_r, atol=2e-5), "spatial attention mismatch"
        assert jnp.allclose(kn, kn_r, atol=2e-5), "kernel attention mismatch"
        assert jnp.allclose(jnp.sum(kn, axis=1), 1.0, atol=1e-5)

    print("KERNEL_OK")
</pallas_src>

<mosaic_0001>
module attributes {stable_mosaic.version = 11 : i64} {
  func.func @_attention_kernel(%arg0: i32, %arg1: i32, %arg2: memref<1x1xf32, #tpu.memory_space<smem>>, %arg3: memref<2x16x1664xf32, #tpu.memory_space<vmem>>, %arg4: memref<16x128xf32, #tpu.memory_space<vmem>>, %arg5: memref<1x128xf32, #tpu.memory_space<vmem>>, %arg6: memref<128x384xf32, #tpu.memory_space<vmem>>, %arg7: memref<1x384xf32, #tpu.memory_space<vmem>>, %arg8: memref<2x1x384xf32, #tpu.memory_space<vmem>>, %arg9: memref<2x16x128xf32, #tpu.memory_space<vmem>>) attributes {dimension_semantics = [#tpu.dimension_semantics<parallel>, #tpu.dimension_semantics<arbitrary>], iteration_bounds = array<i64: 2, 1>, scalar_prefetch = 0 : i64, scratch_operands = 1 : i64, tpu.core_type = #tpu.core_type<tc>, window_params = [{transform_indices = @transform_0, window_bounds = array<i64: 1, 1>}, {transform_indices = @transform_1, window_bounds = array<i64: 2, 16, 1664>}, {pipeline_mode = #tpu.pipeline_mode<synchronous>, transform_indices = @transform_2, window_bounds = array<i64: 16, 128>}, {pipeline_mode = #tpu.pipeline_mode<synchronous>, transform_indices = @transform_3, window_bounds = array<i64: 1, 128>}, {pipeline_mode = #tpu.pipeline_mode<synchronous>, transform_indices = @transform_4, window_bounds = array<i64: 128, 384>}, {pipeline_mode = #tpu.pipeline_mode<synchronous>, transform_indices = @transform_5, window_bounds = array<i64: 1, 384>}, {transform_indices = @transform_6, window_bounds = array<i64: 2, 1, 384>}]} {
    %c0_i32 = arith.constant 0 : i32
    %0 = arith.cmpi eq, %arg1, %c0_i32 : i32
    %1 = arith.extui %0 : i1 to i32
    %c0_i32_0 = arith.constant 0 : i32
    %2 = arith.cmpi ne, %1, %c0_i32_0 : i32
    scf.if %2 {
      %cst_60 = arith.constant 0.000000e+00 : f32
      %140 = vector.broadcast %cst_60 : f32 to vector<2x16x128xf32>
      %c0_61 = arith.constant 0 : index
      %c0_62 = arith.constant 0 : index
      %c0_63 = arith.constant 0 : index
      %141 = vector.load %arg9[%c0_61, %c0_62, %c0_63] : memref<2x16x128xf32, #tpu.memory_space<vmem>>, vector<2x16x128xf32>
      tpu.vector_store %arg9[%c0_61, %c0_62, %c0_63], %140 {strides = array<i32>} : memref<2x16x128xf32, #tpu.memory_space<vmem>>, vector<2x16x128xf32>,
    } else {
    }
    %3 = tpu.iota {dimensions = array<i32: 2>} : vector<1x1x128xi32>
    %c1664_i32 = arith.constant 1664 : i32
    %4 = arith.muli %arg1, %c1664_i32 : i32
    %c0 = arith.constant 0 : index
    %c0_1 = arith.constant 0 : index
    %c0_2 = arith.constant 0 : index
    %5 = vector.load %arg3[%c0, %c0_1, %c0_2] : memref<2x16x1664xf32, #tpu.memory_space<vmem>>, vector<2x16x128xf32>
    %c1600_i32 = arith.constant 1600 : i32
    %6 = arith.subi %c1600_i32, %4 : i32
    %c0_i32_3 = arith.constant 0 : i32
    %7 = arith.subi %6, %c0_i32_3 : i32
    %8 = vector.broadcast %7 : i32 to vector<1x1x128xi32>
    %9 = arith.cmpi slt, %3, %8 : vector<1x1x128xi32>
    %cst = arith.constant 0.000000e+00 : f32
    %10 = vector.shape_cast %9 : vector<1x1x128xi1> to vector<1x1x128xi1>
    %11 = vector.broadcast %10 : vector<1x1x128xi1> to vector<2x16x128xi1>
    %12 = vector.broadcast %cst : f32 to vector<2x16x128xf32>
    %13 = arith.select %11, %5, %12 : vector<2x16x128xi1>, vector<2x16x128xf32>
    %c0_4 = arith.constant 0 : index
    %c0_5 = arith.constant 0 : index
    %c128 = arith.constant 128 : index
    %14 = vector.load %arg3[%c0_4, %c0_5, %c128] : memref<2x16x1664xf32, #tpu.memory_space<vmem>>, vector<2x16x128xf32>
    %c1600_i32_6 = arith.constant 1600 : i32
    %15 = arith.subi %c1600_i32_6, %4 : i32
    %c128_i32 = arith.constant 128 : i32
    %16 = arith.subi %15, %c128_i32 : i32
    %17 = vector.broadcast %16 : i32 to vector<1x1x128xi32>
    %18 = arith.cmpi slt, %3, %17 : vector<1x1x128xi32>
    %cst_7 = arith.constant 0.000000e+00 : f32
    %19 = vector.shape_cast %18 : vector<1x1x128xi1> to vector<1x1x128xi1>
    %20 = vector.broadcast %19 : vector<1x1x128xi1> to vector<2x16x128xi1>
    %21 = vector.broadcast %cst_7 : f32 to vector<2x16x128xf32>
    %22 = arith.select %20, %14, %21 : vector<2x16x128xi1>, vector<2x16x128xf32>
    %23 = arith.addf %13, %22 : vector<2x16x128xf32>
    %c0_8 = arith.constant 0 : index
    %c0_9 = arith.constant 0 : index
    %c256 = arith.constant 256 : index
    %24 = vector.load %arg3[%c0_8, %c0_9, %c256] : memref<2x16x1664xf32, #tpu.memory_space<vmem>>, vector<2x16x128xf32>
    %c1600_i32_10 = arith.constant 1600 : i32
    %25 = arith.subi %c1600_i32_10, %4 : i32
    %c256_i32 = arith.constant 256 : i32
    %26 = arith.subi %25, %c256_i32 : i32
    %27 = vector.broadcast %26 : i32 to vector<1x1x128xi32>
    %28 = arith.cmpi slt, %3, %27 : vector<1x1x128xi32>
    %cst_11 = arith.constant 0.000000e+00 : f32
    %29 = vector.shape_cast %28 : vector<1x1x128xi1> to vector<1x1x128xi1>
    %30 = vector.broadcast %29 : vector<1x1x128xi1> to vector<2x16x128xi1>
    %31 = vector.broadcast %cst_11 : f32 to vector<2x16x128xf32>
    %32 = arith.select %30, %24, %31 : vector<2x16x128xi1>, vector<2x16x128xf32>
    %33 = arith.addf %23, %32 : vector<2x16x128xf32>
    %c0_12 = arith.constant 0 : index
    %c0_13 = arith.constant 0 : index
    %c384 = arith.constant 384 : index
    %34 = vector.load %arg3[%c0_12, %c0_13, %c384] : memref<2x16x1664xf32, #tpu.memory_space<vmem>>, vector<2x16x128xf32>
    %c1600_i32_14 = arith.constant 1600 : i32
    %35 = arith.subi %c1600_i32_14, %4 : i32
    %c384_i32 = arith.constant 384 : i32
    %36 = arith.subi %35, %c384_i32 : i32
    %37 = vector.broadcast %36 : i32 to vector<1x1x128xi32>
    %38 = arith.cmpi slt, %3, %37 : vector<1x1x128xi32>
    %cst_15 = arith.constant 0.000000e+00 : f32
    %39 = vector.shape_cast %38 : vector<1x1x128xi1> to vector<1x1x128xi1>
    %40 = vector.broadcast %39 : vector<1x1x128xi1> to vector<2x16x128xi1>
    %41 = vector.broadcast %cst_15 : f32 to vector<2x16x128xf32>
    %42 = arith.select %40, %34, %41 : vector<2x16x128xi1>, vector<2x16x128xf32>
    %43 = arith.addf %33, %42 : vector<2x16x128xf32>
    %c0_16 = arith.constant 0 : index
    %c0_17 = arith.constant 0 : index
    %c512 = arith.constant 512 : index
    %44 = vector.load %arg3[%c0_16, %c0_17, %c512] : memref<2x16x1664xf32, #tpu.memory_space<vmem>>, vector<2x16x128xf32>
    %c1600_i32_18 = arith.constant 1600 : i32
    %45 = arith.subi %c1600_i32_18, %4 : i32
    %c512_i32 = arith.constant 512 : i32
    %46 = arith.subi %45, %c512_i32 : i32
    %47 = vector.broadcast %46 : i32 to vector<1x1x128xi32>
    %48 = arith.cmpi slt, %3, %47 : vector<1x1x128xi32>
    %cst_19 = arith.constant 0.000000e+00 : f32
    %49 = vector.shape_cast %48 : vector<1x1x128xi1> to vector<1x1x128xi1>
    %50 = vector.broadcast %49 : vector<1x1x128xi1> to vector<2x16x128xi1>
    %51 = vector.broadcast %cst_19 : f32 to vector<2x16x128xf32>
    %52 = arith.select %50, %44, %51 : vector<2x16x128xi1>, vector<2x16x128xf32>
    %53 = arith.addf %43, %52 : vector<2x16x128xf32>
    %c0_20 = arith.constant 0 : index
    %c0_21 = arith.constant 0 : index
    %c640 = arith.constant 640 : index
    %54 = vector.load %arg3[%c0_20, %c0_21, %c640] : memref<2x16x1664xf32, #tpu.memory_space<vmem>>, vector<2x16x128xf32>
    %c1600_i32_22 = arith.constant 1600 : i32
    %55 = arith.subi %c1600_i32_22, %4 : i32
    %c640_i32 = arith.constant 640 : i32
    %56 = arith.subi %55, %c640_i32 : i32
    %57 = vector.broadcast %56 : i32 to vector<1x1x128xi32>
    %58 = arith.cmpi slt, %3, %57 : vector<1x1x128xi32>
    %cst_23 = arith.constant 0.000000e+00 : f32
    %59 = vector.shape_cast %58 : vector<1x1x128xi1> to vector<1x1x128xi1>
    %60 = vector.broadcast %59 : vector<1x1x128xi1> to vector<2x16x128xi1>
    %61 = vector.broadcast %cst_23 : f32 to vector<2x16x128xf32>
    %62 = arith.select %60, %54, %61 : vector<2x16x128xi1>, vector<2x16x128xf32>
    %63 = arith.addf %53, %62 : vector<2x16x128xf32>
    %c0_24 = arith.constant 0 : index
    %c0_25 = arith.constant 0 : index
    %c768 = arith.constant 768 : index
    %64 = vector.load %arg3[%c0_24, %c0_25, %c768] : memref<2x16x1664xf32, #tpu.memory_space<vmem>>, vector<2x16x128xf32>
    %c1600_i32_26 = arith.constant 1600 : i32
    %65 = arith.subi %c1600_i32_26, %4 : i32
    %c768_i32 = arith.constant 768 : i32
    %66 = arith.subi %65, %c768_i32 : i32
    %67 = vector.broadcast %66 : i32 to vector<1x1x128xi32>
    %68 = arith.cmpi slt, %3, %67 : vector<1x1x128xi32>
    %cst_27 = arith.constant 0.000000e+00 : f32
    %69 = vector.shape_cast %68 : vector<1x1x128xi1> to vector<1x1x128xi1>
    %70 = vector.broadcast %69 : vector<1x1x128xi1> to vector<2x16x128xi1>
    %71 = vector.broadcast %cst_27 : f32 to vector<2x16x128xf32>
    %72 = arith.select %70, %64, %71 : vector<2x16x128xi1>, vector<2x16x128xf32>
    %73 = arith.addf %63, %72 : vector<2x16x128xf32>
    %c0_28 = arith.constant 0 : index
    %c0_29 = arith.constant 0 : index
    %c896 = arith.constant 896 : index
    %74 = vector.load %arg3[%c0_28, %c0_29, %c896] : memref<2x16x1664xf32, #tpu.memory_space<vmem>>, vector<2x16x128xf32>
    %c1600_i32_30 = arith.constant 1600 : i32
    %75 = arith.subi %c1600_i32_30, %4 : i32
    %c896_i32 = arith.constant 896 : i32
    %76 = arith.subi %75, %c896_i32 : i32
    %77 = vector.broadcast %76 : i32 to vector<1x1x128xi32>
    %78 = arith.cmpi slt, %3, %77 : vector<1x1x128xi32>
    %cst_31 = arith.constant 0.000000e+00 : f32
    %79 = vector.shape_cast %78 : vector<1x1x128xi1> to vector<1x1x128xi1>
    %80 = vector.broadcast %79 : vector<1x1x128xi1> to vector<2x16x128xi1>
    %81 = vector.broadcast %cst_31 : f32 to vector<2x16x128xf32>
    %82 = arith.select %80, %74, %81 : vector<2x16x128xi1>, vector<2x16x128xf32>
    %83 = arith.addf %73, %82 : vector<2x16x128xf32>
    %c0_32 = arith.constant 0 : index
    %c0_33 = arith.constant 0 : index
    %c1024 = arith.constant 1024 : index
    %84 = vector.load %arg3[%c0_32, %c0_33, %c1024] : memref<2x16x1664xf32, #tpu.memory_space<vmem>>, vector<2x16x128xf32>
    %c1600_i32_34 = arith.constant 1600 : i32
    %85 = arith.subi %c1600_i32_34, %4 : i32
    %c1024_i32 = arith.constant 1024 : i32
    %86 = arith.subi %85, %c1024_i32 : i32
    %87 = vector.broadcast %86 : i32 to vector<1x1x128xi32>
    %88 = arith.cmpi slt, %3, %87 : vector<1x1x128xi32>
    %cst_35 = arith.constant 0.000000e+00 : f32
    %89 = vector.shape_cast %88 : vector<1x1x128xi1> to vector<1x1x128xi1>
    %90 = vector.broadcast %89 : vector<1x1x128xi1> to vector<2x16x128xi1>
    %91 = vector.broadcast %cst_35 : f32 to vector<2x16x128xf32>
    %92 = arith.select %90, %84, %91 : vector<2x16x128xi1>, vector<2x16x128xf32>
    %93 = arith.addf %83, %92 : vector<2x16x128xf32>
    %c0_36 = arith.constant 0 : index
    %c0_37 = arith.constant 0 : index
    %c1152 = arith.constant 1152 : index
    %94 = vector.load %arg3[%c0_36, %c0_37, %c1152] : memref<2x16x1664xf32, #tpu.memory_space<vmem>>, vector<2x16x128xf32>
    %c1600_i32_38 = arith.constant 1600 : i32
    %95 = arith.subi %c1600_i32_38, %4 : i32
    %c1152_i32 = arith.constant 1152 : i32
    %96 = arith.subi %95, %c1152_i32 : i32
    %97 = vector.broadcast %96 : i32 to vector<1x1x128xi32>
    %98 = arith.cmpi slt, %3, %97 : vector<1x1x128xi32>
    %cst_39 = arith.constant 0.000000e+00 : f32
    %99 = vector.shape_cast %98 : vector<1x1x128xi1> to vector<1x1x128xi1>
    %100 = vector.broadcast %99 : vector<1x1x128xi1> to vector<2x16x128xi1>
    %101 = vector.broadcast %cst_39 : f32 to vector<2x16x128xf32>
    %102 = arith.select %100, %94, %101 : vector<2x16x128xi1>, vector<2x16x128xf32>
    %103 = arith.addf %93, %102 : vector<2x16x128xf32>
    %c0_40 = arith.constant 0 : index
    %c0_41 = arith.constant 0 : index
    %c1280 = arith.constant 1280 : index
    %104 = vector.load %arg3[%c0_40, %c0_41, %c1280] : memref<2x16x1664xf32, #tpu.memory_space<vmem>>, vector<2x16x128xf32>
    %c1600_i32_42 = arith.constant 1600 : i32
    %105 = arith.subi %c1600_i32_42, %4 : i32
    %c1280_i32 = arith.constant 1280 : i32
    %106 = arith.subi %105, %c1280_i32 : i32
    %107 = vector.broadcast %106 : i32 to vector<1x1x128xi32>
    %108 = arith.cmpi slt, %3, %107 : vector<1x1x128xi32>
    %cst_43 = arith.constant 0.000000e+00 : f32
    %109 = vector.shape_cast %108 : vector<1x1x128xi1> to vector<1x1x128xi1>
    %110 = vector.broadcast %109 : vector<1x1x128xi1> to vector<2x16x128xi1>
    %111 = vector.broadcast %cst_43 : f32 to vector<2x16x128xf32>
    %112 = arith.select %110, %104, %111 : vector<2x16x128xi1>, vector<2x16x128xf32>
    %113 = arith.addf %103, %112 : vector<2x16x128xf32>
    %c0_44 = arith.constant 0 : index
    %c0_45 = arith.constant 0 : index
    %c1408 = arith.constant 1408 : index
    %114 = vector.load %arg3[%c0_44, %c0_45, %c1408] : memref<2x16x1664xf32, #tpu.memory_space<vmem>>, vector<2x16x128xf32>
    %c1600_i32_46 = arith.constant 1600 : i32
    %115 = arith.subi %c1600_i32_46, %4 : i32
    %c1408_i32 = arith.constant 1408 : i32
    %116 = arith.subi %115, %c1408_i32 : i32
    %117 = vector.broadcast %116 : i32 to vector<1x1x128xi32>
    %118 = arith.cmpi slt, %3, %117 : vector<1x1x128xi32>
    %cst_47 = arith.constant 0.000000e+00 : f32
    %119 = vector.shape_cast %118 : vector<1x1x128xi1> to vector<1x1x128xi1>
    %120 = vector.broadcast %119 : vector<1x1x128xi1> to vector<2x16x128xi1>
    %121 = vector.broadcast %cst_47 : f32 to vector<2x16x128xf32>
    %122 = arith.select %120, %114, %121 : vector<2x16x128xi1>, vector<2x16x128xf32>
    %123 = arith.addf %113, %122 : vector<2x16x128xf32>
    %c0_48 = arith.constant 0 : index
    %c0_49 = arith.constant 0 : index
    %c1536 = arith.constant 1536 : index
    %124 = vector.load %arg3[%c0_48, %c0_49, %c1536] : memref<2x16x1664xf32, #tpu.memory_space<vmem>>, vector<2x16x128xf32>
    %c1600_i32_50 = arith.constant 1600 : i32
    %125 = arith.subi %c1600_i32_50, %4 : i32
    %c1536_i32 = arith.constant 1536 : i32
    %126 = arith.subi %125, %c1536_i32 : i32
    %127 = vector.broadcast %126 : i32 to vector<1x1x128xi32>
    %128 = arith.cmpi slt, %3, %127 : vector<1x1x128xi32>
    %cst_51 = arith.constant 0.000000e+00 : f32
    %129 = vector.shape_cast %128 : vector<1x1x128xi1> to vector<1x1x128xi1>
    %130 = vector.broadcast %129 : vector<1x1x128xi1> to vector<2x16x128xi1>
    %131 = vector.broadcast %cst_51 : f32 to vector<2x16x128xf32>
    %132 = arith.select %130, %124, %131 : vector<2x16x128xi1>, vector<2x16x128xf32>
    %133 = arith.addf %123, %132 : vector<2x16x128xf32>
    %c0_52 = arith.constant 0 : index
    %c0_53 = arith.constant 0 : index
    %c0_54 = arith.constant 0 : index
    %134 = vector.load %arg9[%c0_52, %c0_53, %c0_54] : memref<2x16x128xf32, #tpu.memory_space<vmem>>, vector<2x16x128xf32>
    %135 = arith.addf %134, %133 : vector<2x16x128xf32>
    %c0_55 = arith.constant 0 : index
    %c0_56 = arith.constant 0 : index
    %c0_57 = arith.constant 0 : index
    %136 = vector.load %arg9[%c0_55, %c0_56, %c0_57] : memref<2x16x128xf32, #tpu.memory_space<vmem>>, vector<2x16x128xf32>
    tpu.vector_store %arg9[%c0_55, %c0_56, %c0_57], %135 {strides = array<i32>} : memref<2x16x128xf32, #tpu.memory_space<vmem>>, vector<2x16x128xf32>,
    %c0_i32_58 = arith.constant 0 : i32
    %137 = arith.cmpi eq, %arg1, %c0_i32_58 : i32
    %138 = arith.extui %137 : i1 to i32
    %c0_i32_59 = arith.constant 0 : i32
    %139 = arith.cmpi ne, %138, %c0_i32_59 : i32
    scf.if %139 {
      %c0_60 = arith.constant 0 : index
      %c0_61 = arith.constant 0 : index
      %c0_62 = arith.constant 0 : index
      %140 = vector.load %arg9[%c0_60, %c0_61, %c0_62] : memref<2x16x128xf32, #tpu.memory_space<vmem>>, vector<2x16x128xf32>
      %cst_63 = arith.constant dense<0.000000e+00> : vector<2x16xf32>
      %141 = vector.multi_reduction <add>, %140, %cst_63 [2] : vector<2x16x128xf32> to vector<2x16xf32>
      %cst_64 = arith.constant 6.250000e-04 : f32
      %142 = vector.broadcast %cst_64 : f32 to vector<2x16xf32>
      %143 = arith.mulf %141, %142 : vector<2x16xf32>
      %c0_65 = arith.constant 0 : index
      %c0_66 = arith.constant 0 : index
      %144 = vector.load %arg4[%c0_65, %c0_66] : memref<16x128xf32, #tpu.memory_space<vmem>>, vector<16x128xf32>
      %cst_67 = arith.constant dense<0.000000e+00> : vector<2x128xf32>
      %145 = tpu.matmul %143, %144, %cst_67 {dimension_numbers = #tpu.dot_dimension_numbers<[1], [0], [0], [1], [0, 0, 1, 1], [], []>} : vector<2x16xf32>, vector<16x128xf32>, vector<2x128xf32> -> vector<2x128xf32>
      %c0_68 = arith.constant 0 : index
      %c0_69 = arith.constant 0 : index
      %146 = vector.load %arg5[%c0_68, %c0_69] : memref<1x128xf32, #tpu.memory_space<vmem>>, vector<1x128xf32>
      %147 = vector.broadcast %146 : vector<1x128xf32> to vector<2x128xf32>
      %148 = arith.addf %145, %147 : vector<2x128xf32>
      %cst_70 = arith.constant 0.000000e+00 : f32
      %149 = vector.broadcast %cst_70 : f32 to vector<2x128xf32>
      %150 = arith.maximumf %148, %149 : vector<2x128xf32>
      %c0_71 = arith.constant 0 : index
      %c0_72 = arith.constant 0 : index
      %151 = memref.load %arg2[%c0_71, %c0_72] : memref<1x1xf32, #tpu.memory_space<smem>>
      %cst_73 = arith.constant 1.000000e+00 : f32
      %152 = arith.divf %cst_73, %151 : f32
      %c0_74 = arith.constant 0 : index
      %c0_75 = arith.constant 0 : index
      %153 = vector.load %arg6[%c0_74, %c0_75] : memref<128x384xf32, #tpu.memory_space<vmem>>, vector<128x384xf32>
      %cst_76 = arith.constant dense<0.000000e+00> : vector<2x384xf32>
      %154 = tpu.matmul %150, %153, %cst_76 {dimension_numbers = #tpu.dot_dimension_numbers<[1], [0], [0], [1], [0, 0, 1, 1], [], []>} : vector<2x128xf32>, vector<128x384xf32>, vector<2x384xf32> -> vector<2x384xf32>
      %c0_77 = arith.constant 0 : index
      %c0_78 = arith.constant 0 : index
      %155 = vector.load %arg7[%c0_77, %c0_78] : memref<1x384xf32, #tpu.memory_space<vmem>>, vector<1x384xf32>
      %156 = vector.broadcast %155 : vector<1x384xf32> to vector<2x384xf32>
      %157 = arith.addf %154, %156 : vector<2x384xf32>
      %158 = vector.broadcast %152 : f32 to vector<2x384xf32>
      %159 = arith.mulf %157, %158 : vector<2x384xf32>
      %160 = arith.negf %159 : vector<2x384xf32>
      %161 = math.exp %160 : vector<2x384xf32>
      %cst_79 = arith.constant 1.000000e+00 : f32
      %162 = vector.broadcast %cst_79 : f32 to vector<2x384xf32>
      %163 = arith.addf %162, %161 : vector<2x384xf32>
      %164 = arith.divf %162, %163 : vector<2x384xf32>
      %165 = tpu.iota {dimensions = array<i32: 1>} : vector<2x384xi32>
      %c265_i32 = arith.constant 265 : i32
      %166 = vector.broadcast %c265_i32 : i32 to vector<2x384xi32>
      %167 = arith.cmpi sge, %165, %166 : vector<2x384xi32>
      %c269_i32 = arith.constant 269 : i32
      %168 = vector.broadcast %c269_i32 : i32 to vector<2x384xi32>
      %169 = arith.cmpi slt, %165, %168 : vector<2x384xi32>
      %170 = arith.andi %167, %169 : vector<2x384xi1>
      %cst_80 = arith.constant -1.000000e+30 : f32
      %171 = vector.broadcast %cst_80 : f32 to vector<2x384xf32>
      %172 = arith.select %170, %159, %171 : vector<2x384xi1>, vector<2x384xf32>
      %cst_81 = arith.constant dense<0xFF800000> : vector<2xf32>
      %173 = vector.multi_reduction <maximumf>, %172, %cst_81 [1] : vector<2x384xf32> to vector<2xf32>
      %174 = vector.shape_cast %173 : vector<2xf32> to vector<2x1xf32>
      %175 = vector.broadcast %174 : vector<2x1xf32> to vector<2x384xf32>
      %176 = arith.subf %172, %175 : vector<2x384xf32>
      %177 = math.exp %176 : vector<2x384xf32>
      %cst_82 = arith.constant dense<0.000000e+00> : vector<2xf32>
      %178 = vector.multi_reduction <add>, %177, %cst_82 [1] : vector<2x384xf32> to vector<2xf32>
      %179 = vector.shape_cast %178 : vector<2xf32> to vector<2x1xf32>
      %180 = vector.broadcast %179 : vector<2x1xf32> to vector<2x384xf32>
      %181 = arith.divf %177, %180 : vector<2x384xf32>
      %182 = arith.select %170, %181, %164 : vector<2x384xi1>, vector<2x384xf32>
      %183 = vector.shape_cast %182 : vector<2x384xf32> to vector<2x1x384xf32>
      %c0_83 = arith.constant 0 : index
      %c0_84 = arith.constant 0 : index
      %c0_85 = arith.constant 0 : index
      %184 = vector.load %arg8[%c0_83, %c0_84, %c0_85] : memref<2x1x384xf32, #tpu.memory_space<vmem>>, vector<2x1x384xf32>
      tpu.vector_store %arg8[%c0_83, %c0_84, %c0_85], %183 {strides = array<i32>} : memref<2x1x384xf32, #tpu.memory_space<vmem>>, vector<2x1x384xf32>,
    } else {
    }
    return
  }
  func.func @transform_0(%arg0: i32, %arg1: i32) -> (i32, i32) {
    %c0_i32 = arith.constant 0 : i32
    %c0_i32_0 = arith.constant 0 : i32
    %c0_i32_1 = arith.constant 0 : i32
    return %c0_i32, %c0_i32_0 : i32, i32
  }
  func.func @transform_1(%arg0: i32, %arg1: i32) -> (i32, i32, i32) {
    %c0_i32 = arith.constant 0 : i32
    %c0_i32_0 = arith.constant 0 : i32
    return %arg0, %c0_i32, %arg1 : i32, i32, i32
  }
  func.func @transform_2(%arg0: i32, %arg1: i32) -> (i32, i32) {
    %c0_i32 = arith.constant 0 : i32
    %c0_i32_0 = arith.constant 0 : i32
    %c0_i32_1 = arith.constant 0 : i32
    return %c0_i32, %c0_i32_0 : i32, i32
  }
  func.func @transform_3(%arg0: i32, %arg1: i32) -> (i32, i32) {
    %c0_i32 = arith.constant 0 : i32
    %c0_i32_0 = arith.constant 0 : i32
    %c0_i32_1 = arith.constant 0 : i32
    return %c0_i32, %c0_i32_0 : i32, i32
  }
  func.func @transform_4(%arg0: i32, %arg1: i32) -> (i32, i32) {
    %c0_i32 = arith.constant 0 : i32
    %c0_i32_0 = arith.constant 0 : i32
    %c0_i32_1 = arith.constant 0 : i32
    return %c0_i32, %c0_i32_0 : i32, i32
  }
  func.func @transform_5(%arg0: i32, %arg1: i32) -> (i32, i32) {
    %c0_i32 = arith.constant 0 : i32
    %c0_i32_0 = arith.constant 0 : i32
    %c0_i32_1 = arith.constant 0 : i32
    return %c0_i32, %c0_i32_0 : i32, i32
  }
  func.func @transform_6(%arg0: i32, %arg1: i32) -> (i32, i32, i32) {
    %c0_i32 = arith.constant 0 : i32
    %c0_i32_0 = arith.constant 0 : i32
    %c0_i32_1 = arith.constant 0 : i32
    return %arg0, %c0_i32, %c0_i32_0 : i32, i32, i32
  }
}

</mosaic_0001>

<llo_original>
// kernel: attention_forward.1
$region0: #{attention_forward.1}
  #allocation0 [shape = 'u32[]', space=smem, size = 0x4, offset = 0x4, fixed_abs, tag = 'smem constant byte address 0x4 - core index']
  #allocation1 [shape = 'u32[144,128]{1,0:T(1,128)}', space=vmem, size = 0x12000, scoped, tag = 'internal scratch']
  #allocation2 [shape = 'f32[2,16,128]{2,1,0:T(8,128)}', space=vmem, size = 0x4000, scoped, tag = 'scratch operand']
  #allocation3 [shape = 'f32[1,1]{1,0:T(1,128)S(6)}', space=smem, size = 0x200, scoped, tag = 'scoped memory for attention_forward.1']
  %s0 = inlined_call_operand.<no memory space> [shape: f32[1,1], index: 0, kind: input, shape index: {}]
  %s1 = inlined_call_operand.vmem [shape: f32[4,16,1600], index: 1, kind: input, shape index: {}]
  %s2 = inlined_call_operand.vmem [shape: f32[16,128], index: 2, kind: input, shape index: {}]
  %s3 = inlined_call_operand.vmem [shape: f32[1,128], index: 3, kind: input, shape index: {}]
  %s4 = inlined_call_operand.vmem [shape: f32[128,384], index: 4, kind: input, shape index: {}]
  %s5 = inlined_call_operand.vmem [shape: f32[1,384], index: 5, kind: input, shape index: {}]
  %s6 = inlined_call_operand.vmem [shape: f32[4,1,384], index: 6, kind: output, shape index: {}]
  %s7 = sld [smem:[#allocation0]]
  $region65: #{attention_forward.1} parent=0
    _
  %s9 = ssub.s32 1, %s7
  %s10 = scalar_select 0, %s9, %s7
  %11 = sst [smem:[#allocation3]] %s0
  loop: start=0, step=1, limit=4
  $region2: #{attention_forward.1} parent=0 // loop_pre_header
    _
  $region3: #{attention_forward.1} parent=0 // loop_header
    %s13 = sphi 0, %s17
    %p14 = scmp.ge.s32.totalorder %s13, 4
    %s20 = sphi 0, %s32
    %s21 = sphi 0, %s28
    %s22 = sphi 0, %s20
    %s23 = sphi 0, %s21
    %s24 = sphi 0, %s22
    %s25 = sphi 0, %s23
    %s33 = sphi 0, %s33
    %s35 = sphi 0, %s33
    %s36 = sphi 0, %s35
    %s50 = sphi 0, %s36
    %s58 = sphi 0, %s60
    %s61 = sphi 0, %s58
    %s62 = sphi 0, %s61
    %s78 = sphi 0, %s62
    %s82 = sphi 0, %s82
    %s84 = sphi 0, %s82
    %s85 = sphi 0, %s84
    %s99 = sphi 0, %s85
    %s103 = sphi 0, %s103
    %s105 = sphi 0, %s103
    %s106 = sphi 0, %s105
    %s120 = sphi 0, %s106
    %s124 = sphi 0, %s124
    %s126 = sphi 0, %s124
    %s127 = sphi 0, %s126
    %s141 = sphi 0, %s127
    %s145 = sphi 0, %s145
    %s147 = sphi 0, %s145
    %s148 = sphi 0, %s147
    %s162 = sphi 0, %s148
    %s168 = sphi 0, %s170
    %s171 = sphi 0, %s168
    %s172 = sphi 0, %s171
    %s188 = sphi 0, %s172
  $region4: #{attention_forward.1} parent=0 // loop_header_branch
    %16 = sbr.rel (%p14) target = $region8
  $region5: #{attention_forward.1} parent=0 // loop_body
    %s18 = ssub.s32 %s13, 1
    %s19 = ssub.s32 %s13, 2
    %s26 = sadd.s32 1, %s21
    %p27 = scmp.ge.s32.totalorder %s26, 1
    %s28 = scalar_select %p27, 0, %s26
    %s29 = sadd.s32 1, %s20
    %s30 = scalar_select %p27, %s29, %s20
    %p31 = scmp.ge.s32.totalorder %s30, 2
    %s32 = scalar_select %p31, 0, %s30
    %s34 = sadd.s32 %s33, 1
    %p37 = scmp.eq.s32.totalorder %s13, 1
    %p38 = scmp.ne.s32.totalorder %s33, %s35
    %p39 = scmp.eq.s32.totalorder %s13, 0
    %p40 = por %p38, %p39
    %p41 = scmp.ne.s32.totalorder %s33, %s35
    %p42 = scmp.eq.s32.totalorder %s18, 1
    %p43 = por %p41, %p42
    %p44 = scmp.ne.s32.totalorder %s35, %s36
    %p45 = scmp.eq.s32.totalorder %s18, 0
    %p46 = por %p44, %p45
    %p47 = scmp.ne.s32.totalorder %s35, %s36
    %p48 = scmp.eq.s32.totalorder %s19, 1
    %p49 = por %p47, %p48
    %p51 = scmp.ne.s32.totalorder %s36, %s50
    %p52 = scmp.eq.s32.totalorder %s19, 0
    %p53 = por %p51, %p52
    %s54 = ssub.s32 %s20, %s32
    %s55 = ssub.s32 %s21, %s28
    %s56 = sor.u32 %s54, %s55
    %p57 = scmp.eq.s32.totalorder %s56, 0
    %s59 = sadd.s32 %s58, 1
    %s60 = scalar_select %p57, %s58, %s59
    %p63 = pneg %p57
    %p64 = scmp.eq.s32.totalorder %s13, 1
    %p65 = por %p63, %p64
    %p66 = scmp.ne.s32.totalorder %s58, %s61
    %p67 = scmp.eq.s32.totalorder %s13, 0
    %p68 = por %p66, %p67
    %p69 = scmp.ne.s32.totalorder %s58, %s61
    %p70 = scmp.eq.s32.totalorder %s18, 1
    %p71 = por %p69, %p70
    %p72 = scmp.ne.s32.totalorder %s61, %s62
    %p73 = scmp.eq.s32.totalorder %s18, 0
    %p74 = por %p72, %p73
    %p75 = scmp.ne.s32.totalorder %s61, %s62
    %p76 = scmp.eq.s32.totalorder %s19, 1
    %p77 = por %p75, %p76
    %p79 = scmp.ne.s32.totalorder %s62, %s78
    %p80 = scmp.eq.s32.totalorder %s19, 0
    %p81 = por %p79, %p80
    %s83 = sadd.s32 %s82, 1
    %p86 = scmp.eq.s32.totalorder %s13, 1
    %p87 = scmp.ne.s32.totalorder %s82, %s84
    %p88 = scmp.eq.s32.totalorder %s13, 0
    %p89 = por %p87, %p88
    %p90 = scmp.ne.s32.totalorder %s82, %s84
    %p91 = scmp.eq.s32.totalorder %s18, 1
    %p92 = por %p90, %p91
    %p93 = scmp.ne.s32.totalorder %s84, %s85
    %p94 = scmp.eq.s32.totalorder %s18, 0
    %p95 = por %p93, %p94
    %p96 = scmp.ne.s32.totalorder %s84, %s85
    %p97 = scmp.eq.s32.totalorder %s19, 1
    %p98 = por %p96, %p97
    %p100 = scmp.ne.s32.totalorder %s85, %s99
    %p101 = scmp.eq.s32.totalorder %s19, 0
    %p102 = por %p100, %p101
    %s104 = sadd.s32 %s103, 1
    %p107 = scmp.eq.s32.totalorder %s13, 1
    %p108 = scmp.ne.s32.totalorder %s103, %s105
    %p109 = scmp.eq.s32.totalorder %s13, 0
    %p110 = por %p108, %p109
    %p111 = scmp.ne.s32.totalorder %s103, %s105
    %p112 = scmp.eq.s32.totalorder %s18, 1
    %p113 = por %p111, %p112
    %p114 = scmp.ne.s32.totalorder %s105, %s106
    %p115 = scmp.eq.s32.totalorder %s18, 0
    %p116 = por %p114, %p115
    %p117 = scmp.ne.s32.totalorder %s105, %s106
    %p118 = scmp.eq.s32.totalorder %s19, 1
    %p119 = por %p117, %p118
    %p121 = scmp.ne.s32.totalorder %s106, %s120
    %p122 = scmp.eq.s32.totalorder %s19, 0
    %p123 = por %p121, %p122
    %s125 = sadd.s32 %s124, 1
    %p128 = scmp.eq.s32.totalorder %s13, 1
    %p129 = scmp.ne.s32.totalorder %s124, %s126
    %p130 = scmp.eq.s32.totalorder %s13, 0
    %p131 = por %p129, %p130
    %p132 = scmp.ne.s32.totalorder %s124, %s126
    %p133 = scmp.eq.s32.totalorder %s18, 1
    %p134 = por %p132, %p133
    %p135 = scmp.ne.s32.totalorder %s126, %s127
    %p136 = scmp.eq.s32.totalorder %s18, 0
    %p137 = por %p135, %p136
    %p138 = scmp.ne.s32.totalorder %s126, %s127
    %p139 = scmp.eq.s32.totalorder %s19, 1
    %p140 = por %p138, %p139
    %p142 = scmp.ne.s32.totalorder %s127, %s141
    %p143 = scmp.eq.s32.totalorder %s19, 0
    %p144 = por %p142, %p143
    %s146 = sadd.s32 %s145, 1
    %p149 = scmp.eq.s32.totalorder %s13, 1
    %p150 = scmp.ne.s32.totalorder %s145, %s147
    %p151 = scmp.eq.s32.totalorder %s13, 0
    %p152 = por %p150, %p151
    %p153 = scmp.ne.s32.totalorder %s145, %s147
    %p154 = scmp.eq.s32.totalorder %s18, 1
    %p155 = por %p153, %p154
    %p156 = scmp.ne.s32.totalorder %s147, %s148
    %p157 = scmp.eq.s32.totalorder %s18, 0
    %p158 = por %p156, %p157
    %p159 = scmp.ne.s32.totalorder %s147, %s148
    %p160 = scmp.eq.s32.totalorder %s19, 1
    %p161 = por %p159, %p160
    %p163 = scmp.ne.s32.totalorder %s148, %s162
    %p164 = scmp.eq.s32.totalorder %s19, 0
    %p165 = por %p163, %p164
    %s166 = ssub.s32 %s20, %s32
    %p167 = scmp.eq.s32.totalorder %s166, 0
    %s169 = sadd.s32 %s168, 1
    %s170 = scalar_select %p167, %s168, %s169
    %p173 = pneg %p167
    %p174 = scmp.eq.s32.totalorder %s13, 1
    %p175 = por %p173, %p174
    %p176 = scmp.ne.s32.totalorder %s168, %s171
    %p177 = scmp.eq.s32.totalorder %s13, 0
    %p178 = por %p176, %p177
    %p179 = scmp.ne.s32.totalorder %s168, %s171
    %p180 = scmp.eq.s32.totalorder %s18, 1
    %p181 = por %p179, %p180
    %p182 = scmp.ne.s32.totalorder %s171, %s172
    %p183 = scmp.eq.s32.totalorder %s18, 0
    %p184 = por %p182, %p183
    %p185 = scmp.ne.s32.totalorder %s171, %s172
    %p186 = scmp.eq.s32.totalorder %s19, 1
    %p187 = por %p185, %p186
    %p189 = scmp.ne.s32.totalorder %s172, %s188
    %p190 = scmp.eq.s32.totalorder %s19, 0
    %p191 = por %p189, %p190
    %p192 = scmp.le.s32.totalorder 1, %s13
    %p193 = scmp.lt.s32.totalorder %s13, 3
    %p194 = pnand %p192, %p193
    %p195 = pneg %p194
    // Predicated region
    $region9: #{attention_forward.1} parent=5 // pred_check
      _
    $region10: #{attention_forward.1} parent=5 // pred_check_branch
      %197 = sbr.rel (%p194) target = $region12
    $region11: #{attention_forward.1} parent=5 // pred_region
      %s198 = ssub.s32 %s13, 1
      // Predicated region
      $region13: #{attention_forward.1} parent=11 // pred_check
        %p199 = pneg %p46
      $region14: #{attention_forward.1} parent=11 // pred_check_branch
        %201 = sbr.rel (%p199) target = $region16
      $region15: #{attention_forward.1} parent=11 // pred_region
        _
      $region16: #{attention_forward.1} parent=11 // pred_fallthru
        _
      // Predicated region
      $region17: #{attention_forward.1} parent=11 // pred_check
        %p202 = pneg %p95
      $region18: #{attention_forward.1} parent=11 // pred_check_branch
        %204 = sbr.rel (%p202) target = $region20
      $region19: #{attention_forward.1} parent=11 // pred_region
        _
      $region20: #{attention_forward.1} parent=11 // pred_fallthru
        _
      // Predicated region
      $region21: #{attention_forward.1} parent=11 // pred_check
        %p205 = pneg %p116
      $region22: #{attention_forward.1} parent=11 // pred_check_branch
        %207 = sbr.rel (%p205) target = $region24
      $region23: #{attention_forward.1} parent=11 // pred_region
        _
      $region24: #{attention_forward.1} parent=11 // pred_fallthru
        _
      // Predicated region
      $region25: #{attention_forward.1} parent=11 // pred_check
        %p208 = pneg %p137
      $region26: #{attention_forward.1} parent=11 // pred_check_branch
        %210 = sbr.rel (%p208) target = $region28
      $region27: #{attention_forward.1} parent=11 // pred_region
        _
      $region28: #{attention_forward.1} parent=11 // pred_fallthru
        _
      // Predicated region
      $region29: #{attention_forward.1} parent=11 // pred_check
        %p211 = pneg %p158
      $region30: #{attention_forward.1} parent=11 // pred_check_branch
        %213 = sbr.rel (%p211) target = $region32
      $region31: #{attention_forward.1} parent=11 // pred_region
        _
      $region32: #{attention_forward.1} parent=11 // pred_fallthru
        _
    $region12: #{attention_forward.1} parent=5 // pred_fallthru
      _
    %p214 = scmp.lt.s32.totalorder %s13, 2
    // Predicated region
    $region33: #{attention_forward.1} parent=5 // pred_check
      %p215 = pneg %p214
    $region34: #{attention_forward.1} parent=5 // pred_check_branch
      %217 = sbr.rel (%p215) target = $region36
    $region35: #{attention_forward.1} parent=5 // pred_region
      // Predicated region
      $region37: #{attention_forward.1} parent=35 // pred_check
        %p218 = pneg %p68
      $region38: #{attention_forward.1} parent=35 // pred_check_branch
        %220 = sbr.rel (%p218) target = $region40
      $region39: #{attention_forward.1} parent=35 // pred_region
        %s221 = smul.u32 2, %s20
        %s222 = smul.u32 13, %s21
        %p223 = scmp.lt.s32.totalorder %s221, 3
        %s224 = scalar_select %p223, %s221, 3
        %p225 = scmp.lt.s32.totalorder %s222, 12
        %s226 = scalar_select %p225, %s222, 12
        %s227 = smul.addr %s224, 26
        %s228 = sadd.s32 %s226, %s227
        %s229 = smul.addr %s228, 8
        %s230 = scalar_lea.vmem %s1, %s229
        %s231 = smul.u32 2, %s20
        %s232 = smul.u32 13, %s21
      $region40: #{attention_forward.1} parent=35 // pred_fallthru
        _
    $region36: #{attention_forward.1} parent=5 // pred_fallthru
      _
    %p233 = scmp.le.s32.totalorder 1, %s13
    %p234 = scmp.lt.s32.totalorder %s13, 3
    %p235 = pnand %p233, %p234
    %p236 = pneg %p235
    // Predicated region
    $region41: #{attention_forward.1} parent=5 // pred_check
      _
    $region42: #{attention_forward.1} parent=5 // pred_check_branch
      %238 = sbr.rel (%p235) target = $region44
    $region43: #{attention_forward.1} parent=5 // pred_region
      %s239 = ssub.s32 %s13, 1
      %p240 = pneg %p46
      %p241 = pneg %p43
      %s242 = smul.u32 2, %s22
      %s243 = smul.u32 13, %s23
      %p244 = scmp.lt.s32.totalorder %s242, 3
      %s245 = scalar_select %p244, %s242, 3
      %p246 = scmp.lt.s32.totalorder %s243, 12
      %s247 = scalar_select %p246, %s243, 12
      %s248 = smul.addr %s245, 26
      %s249 = sadd.s32 %s247, %s248
      %s250 = smul.addr %s249, 8
      %s251 = scalar_lea.vmem %s1, %s250
      %p252 = pneg %p74
      %p253 = pneg %p71
      %p254 = pneg %p95
      %p255 = pneg %p92
      %p256 = pneg %p116
      %p257 = pneg %p113
      %p258 = pneg %p137
      %p259 = pneg %p134
      %p260 = pneg %p158
      %p261 = pneg %p155
      %p262 = pneg %p184
      %p263 = pneg %p181
      %s264 = smul.u32 2, %s22
      %p265 = scmp.lt.s32.totalorder %s264, 3
      %s266 = scalar_select %p265, %s264, 3
      %s267 = smul.addr %s266, 3
      %s268 = scalar_lea.vmem %s6, %s267
      %s269 = smul.u32 2, %s22
      %s270 = smul.u32 13, %s23
      %p271 = scmp.lt.s32.totalorder %s269, 3
      %s272 = scalar_select %p271, %s269, 3
      %p273 = scmp.lt.s32.totalorder %s270, 12
      %s274 = scalar_select %p273, %s270, 12
      %s275 = smul.addr %s272, 26
      %s276 = sadd.s32 %s274, %s275
      %s277 = smul.addr %s276, 8
      %s278 = scalar_lea.vmem %s1, %s277
      %s279 = smul.u32 2, %s22
      %s280 = smul.u32 13, %s23
      %s281 = smul.u32 2, %s22
      %p282 = scmp.lt.s32.totalorder %s281, 3
      %s283 = scalar_select %p282, %s281, 3
      %s284 = smul.addr %s283, 3
      %s285 = scalar_lea.vmem %s6, %s284
      %s286 = smul.u32 2, %s22
      %p287 = scmp.eq.s32.totalorder %s23, 0
      // Predicated region
      $region45: #{attention_forward.1} parent=43 // pred_check
        %p288 = pneg %p287
      $region46: #{attention_forward.1} parent=43 // pred_check_branch
        %290 = sbr.rel (%p288) target = $region48
      $region47: #{attention_forward.1} parent=43 // pred_region
        %291 = vst [vmem:[#allocation2] sm:$0xff] 0.0
        %292 = vst [vmem:[#allocation2 + $0x8] sm:$0xff] 0.0
        %293 = vst [vmem:[#allocation2 + $0x10] sm:$0xff] 0.0
        %294 = vst [vmem:[#allocation2 + $0x18] sm:$0xff] 0.0
      $region48: #{attention_forward.1} parent=43 // pred_fallthru
        _
      %v295 = vlaneseq
      %v296 = vand.u32 %v295, 127
      %s297 = smul.u32 %s23, 1664
      %v298 = vld [vmem:[%s278] sm:$0xff]
      %v299 = vld [vmem:[%s278 + $0x68] sm:$0xff]
      %v300 = vld [vmem:[%s278 + $0xd0] sm:$0xff]
      %v301 = vld [vmem:[%s278 + $0x138] sm:$0xff]
      %s302 = ssub.s32 1600, %s297
      %v303 = vstv %s302
      %vm304 = vcmp.lt.s32.totalorder %v296, %v303
      %v305 = vsel %vm304, 1, 0
      %vm306 = vcmp.eq.s32.totalorder %v305, 1
      %v307 = vsel %vm306, %v298, 0.0
      %v308 = vsel %vm306, %v299, 0.0
      %v309 = vsel %vm306, %v300, 0.0
      %v310 = vsel %vm306, %v301, 0.0
      %v311 = vld [vmem:[%s278 + $0x8] sm:$0xff]
      %v312 = vld [vmem:[%s278 + $0x70] sm:$0xff]
      %v313 = vld [vmem:[%s278 + $0xd8] sm:$0xff]
      %v314 = vld [vmem:[%s278 + $0x140] sm:$0xff]
      %s315 = ssub.s32 1472, %s297
      %v316 = vstv %s315
      %vm317 = vcmp.lt.s32.totalorder %v296, %v316
      %v318 = vsel %vm317, 1, 0
      %vm319 = vcmp.eq.s32.totalorder %v318, 1
      %v320 = vsel %vm319, %v311, 0.0
      %v321 = vsel %vm319, %v312, 0.0
      %v322 = vsel %vm319, %v313, 0.0
      %v323 = vsel %vm319, %v314, 0.0
      %v324 = vadd.f32 %v307, %v320
      %v325 = vadd.f32 %v308, %v321
      %v326 = vadd.f32 %v309, %v322
      %v327 = vadd.f32 %v310, %v323
      %v328 = vld [vmem:[%s278 + $0x10] sm:$0xff]
      %v329 = vld [vmem:[%s278 + $0x78] sm:$0xff]
      %v330 = vld [vmem:[%s278 + $0xe0] sm:$0xff]
      %v331 = vld [vmem:[%s278 + $0x148] sm:$0xff]
      %s332 = ssub.s32 1344, %s297
      %v333 = vstv %s332
      %vm334 = vcmp.lt.s32.totalorder %v296, %v333
      %v335 = vsel %vm334, 1, 0
      %vm336 = vcmp.eq.s32.totalorder %v335, 1
      %v337 = vsel %vm336, %v328, 0.0
      %v338 = vsel %vm336, %v329, 0.0
      %v339 = vsel %vm336, %v330, 0.0
      %v340 = vsel %vm336, %v331, 0.0
      %v341 = vadd.f32 %v324, %v337
      %v342 = vadd.f32 %v325, %v338
      %v343 = vadd.f32 %v326, %v339
      %v344 = vadd.f32 %v327, %v340
      %v345 = vld [vmem:[%s278 + $0x18] sm:$0xff]
      %v346 = vld [vmem:[%s278 + $0x80] sm:$0xff]
      %v347 = vld [vmem:[%s278 + $0xe8] sm:$0xff]
      %v348 = vld [vmem:[%s278 + $0x150] sm:$0xff]
      %s349 = ssub.s32 1216, %s297
      %v350 = vstv %s349
      %vm351 = vcmp.lt.s32.totalorder %v296, %v350
      %v352 = vsel %vm351, 1, 0
      %vm353 = vcmp.eq.s32.totalorder %v352, 1
      %v354 = vsel %vm353, %v345, 0.0
      %v355 = vsel %vm353, %v346, 0.0
      %v356 = vsel %vm353, %v347, 0.0
      %v357 = vsel %vm353, %v348, 0.0
      %v358 = vadd.f32 %v341, %v354
      %v359 = vadd.f32 %v342, %v355
      %v360 = vadd.f32 %v343, %v356
      %v361 = vadd.f32 %v344, %v357
      %v362 = vld [vmem:[%s278 + $0x20] sm:$0xff]
      %v363 = vld [vmem:[%s278 + $0x88] sm:$0xff]
      %v364 = vld [vmem:[%s278 + $0xf0] sm:$0xff]
      %v365 = vld [vmem:[%s278 + $0x158] sm:$0xff]
      %s366 = ssub.s32 1088, %s297
      %v367 = vstv %s366
      %vm368 = vcmp.lt.s32.totalorder %v296, %v367
      %v369 = vsel %vm368, 1, 0
      %vm370 = vcmp.eq.s32.totalorder %v369, 1
      %v371 = vsel %vm370, %v362, 0.0
      %v372 = vsel %vm370, %v363, 0.0
      %v373 = vsel %vm370, %v364, 0.0
      %v374 = vsel %vm370, %v365, 0.0
      %v375 = vadd.f32 %v358, %v371
      %v376 = vadd.f32 %v359, %v372
      %v377 = vadd.f32 %v360, %v373
      %v378 = vadd.f32 %v361, %v374
      %v379 = vld [vmem:[%s278 + $0x28] sm:$0xff]
      %v380 = vld [vmem:[%s278 + $0x90] sm:$0xff]
      %v381 = vld [vmem:[%s278 + $0xf8] sm:$0xff]
      %v382 = vld [vmem:[%s278 + $0x160] sm:$0xff]
      %s383 = ssub.s32 960, %s297
      %v384 = vstv %s383
      %vm385 = vcmp.lt.s32.totalorder %v296, %v384
      %v386 = vsel %vm385, 1, 0
      %vm387 = vcmp.eq.s32.totalorder %v386, 1
      %v388 = vsel %vm387, %v379, 0.0
      %v389 = vsel %vm387, %v380, 0.0
      %v390 = vsel %vm387, %v381, 0.0
      %v391 = vsel %vm387, %v382, 0.0
      %v392 = vadd.f32 %v375, %v388
      %v393 = vadd.f32 %v376, %v389
      %v394 = vadd.f32 %v377, %v390
      %v395 = vadd.f32 %v378, %v391
      %v396 = vld [vmem:[%s278 + $0x30] sm:$0xff]
      %v397 = vld [vmem:[%s278 + $0x98] sm:$0xff]
      %v398 = vld [vmem:[%s278 + $0x100] sm:$0xff]
      %v399 = vld [vmem:[%s278 + $0x168] sm:$0xff]
      %s400 = ssub.s32 832, %s297
      %v401 = vstv %s400
      %vm402 = vcmp.lt.s32.totalorder %v296, %v401
      %v403 = vsel %vm402, 1, 0
      %vm404 = vcmp.eq.s32.totalorder %v403, 1
      %v405 = vsel %vm404, %v396, 0.0
      %v406 = vsel %vm404, %v397, 0.0
      %v407 = vsel %vm404, %v398, 0.0
      %v408 = vsel %vm404, %v399, 0.0
      %v409 = vadd.f32 %v392, %v405
      %v410 = vadd.f32 %v393, %v406
      %v411 = vadd.f32 %v394, %v407
      %v412 = vadd.f32 %v395, %v408
      %v413 = vld [vmem:[%s278 + $0x38] sm:$0xff]
      %v414 = vld [vmem:[%s278 + $0xa0] sm:$0xff]
      %v415 = vld [vmem:[%s278 + $0x108] sm:$0xff]
      %v416 = vld [vmem:[%s278 + $0x170] sm:$0xff]
      %s417 = ssub.s32 704, %s297
      %v418 = vstv %s417
      %vm419 = vcmp.lt.s32.totalorder %v296, %v418
      %v420 = vsel %vm419, 1, 0
      %vm421 = vcmp.eq.s32.totalorder %v420, 1
      %v422 = vsel %vm421, %v413, 0.0
      %v423 = vsel %vm421, %v414, 0.0
      %v424 = vsel %vm421, %v415, 0.0
      %v425 = vsel %vm421, %v416, 0.0
      %v426 = vadd.f32 %v409, %v422
      %v427 = vadd.f32 %v410, %v423
      %v428 = vadd.f32 %v411, %v424
      %v429 = vadd.f32 %v412, %v425
      %v430 = vld [vmem:[%s278 + $0x40] sm:$0xff]
      %v431 = vld [vmem:[%s278 + $0xa8] sm:$0xff]
      %v432 = vld [vmem:[%s278 + $0x110] sm:$0xff]
      %v433 = vld [vmem:[%s278 + $0x178] sm:$0xff]
      %s434 = ssub.s32 576, %s297
      %v435 = vstv %s434
      %vm436 = vcmp.lt.s32.totalorder %v296, %v435
      %v437 = vsel %vm436, 1, 0
      %vm438 = vcmp.eq.s32.totalorder %v437, 1
      %v439 = vsel %vm438, %v430, 0.0
      %v440 = vsel %vm438, %v431, 0.0
      %v441 = vsel %vm438, %v432, 0.0
      %v442 = vsel %vm438, %v433, 0.0
      %v443 = vadd.f32 %v426, %v439
      %v444 = vadd.f32 %v427, %v440
      %v445 = vadd.f32 %v428, %v441
      %v446 = vadd.f32 %v429, %v442
      %v447 = vld [vmem:[%s278 + $0x48] sm:$0xff]
      %v448 = vld [vmem:[%s278 + $0xb0] sm:$0xff]
      %v449 = vld [vmem:[%s278 + $0x118] sm:$0xff]
      %v450 = vld [vmem:[%s278 + $0x180] sm:$0xff]
      %s451 = ssub.s32 448, %s297
      %v452 = vstv %s451
      %vm453 = vcmp.lt.s32.totalorder %v296, %v452
      %v454 = vsel %vm453, 1, 0
      %vm455 = vcmp.eq.s32.totalorder %v454, 1
      %v456 = vsel %vm455, %v447, 0.0
      %v457 = vsel %vm455, %v448, 0.0
      %v458 = vsel %vm455, %v449, 0.0
      %v459 = vsel %vm455, %v450, 0.0
      %v460 = vadd.f32 %v443, %v456
      %v461 = vadd.f32 %v444, %v457
      %v462 = vadd.f32 %v445, %v458
      %v463 = vadd.f32 %v446, %v459
      %v464 = vld [vmem:[%s278 + $0x50] sm:$0xff]
      %v465 = vld [vmem:[%s278 + $0xb8] sm:$0xff]
      %v466 = vld [vmem:[%s278 + $0x120] sm:$0xff]
      %v467 = vld [vmem:[%s278 + $0x188] sm:$0xff]
      %s468 = ssub.s32 320, %s297
      %v469 = vstv %s468
      %vm470 = vcmp.lt.s32.totalorder %v296, %v469
      %v471 = vsel %vm470, 1, 0
      %vm472 = vcmp.eq.s32.totalorder %v471, 1
      %v473 = vsel %vm472, %v464, 0.0
      %v474 = vsel %vm472, %v465, 0.0
      %v475 = vsel %vm472, %v466, 0.0
      %v476 = vsel %vm472, %v467, 0.0
      %v477 = vadd.f32 %v460, %v473
      %v478 = vadd.f32 %v461, %v474
      %v479 = vadd.f32 %v462, %v475
      %v480 = vadd.f32 %v463, %v476
      %v481 = vld [vmem:[%s278 + $0x58] sm:$0xff]
      %v482 = vld [vmem:[%s278 + $0xc0] sm:$0xff]
      %v483 = vld [vmem:[%s278 + $0x128] sm:$0xff]
      %v484 = vld [vmem:[%s278 + $0x190] sm:$0xff]
      %s485 = ssub.s32 192, %s297
      %v486 = vstv %s485
      %vm487 = vcmp.lt.s32.totalorder %v296, %v486
      %v488 = vsel %vm487, 1, 0
      %vm489 = vcmp.eq.s32.totalorder %v488, 1
      %v490 = vsel %vm489, %v481, 0.0
      %v491 = vsel %vm489, %v482, 0.0
      %v492 = vsel %vm489, %v483, 0.0
      %v493 = vsel %vm489, %v484, 0.0
      %v494 = vadd.f32 %v477, %v490
      %v495 = vadd.f32 %v478, %v491
      %v496 = vadd.f32 %v479, %v492
      %v497 = vadd.f32 %v480, %v493
      %v498 = vld [vmem:[%s278 + $0x60] sm:$0xff]
      %v499 = vld [vmem:[%s278 + $0xc8] sm:$0xff]
      %v500 = vld [vmem:[%s278 + $0x130] sm:$0xff]
      %v501 = vld [vmem:[%s278 + $0x198] sm:$0xff]
      %s502 = ssub.s32 64, %s297
      %v503 = vstv %s502
      %vm504 = vcmp.lt.s32.totalorder %v296, %v503
      %v505 = vsel %vm504, 1, 0
      %vm506 = vcmp.eq.s32.totalorder %v505, 1
      %v507 = vsel %vm506, %v498, 0.0
      %v508 = vsel %vm506, %v499, 0.0
      %v509 = vsel %vm506, %v500, 0.0
      %v510 = vsel %vm506, %v501, 0.0
      %v511 = vadd.f32 %v494, %v507
      %v512 = vadd.f32 %v495, %v508
      %v513 = vadd.f32 %v496, %v509
      %v514 = vadd.f32 %v497, %v510
      %v515 = vld [vmem:[#allocation2] sm:$0xff]
      %v516 = vld [vmem:[#allocation2 + $0x8] sm:$0xff]
      %v517 = vld [vmem:[#allocation2 + $0x10] sm:$0xff]
      %v518 = vld [vmem:[#allocation2 + $0x18] sm:$0xff]
      %v519 = vadd.f32 %v515, %v511
      %v520 = vadd.f32 %v516, %v512
      %v521 = vadd.f32 %v517, %v513
      %v522 = vadd.f32 %v518, %v514
      %523 = vst [vmem:[#allocation2] sm:$0xff] %v519
      %524 = vst [vmem:[#allocation2 + $0x8] sm:$0xff] %v520
      %525 = vst [vmem:[#allocation2 + $0x10] sm:$0xff] %v521
      %526 = vst [vmem:[#allocation2 + $0x18] sm:$0xff] %v522
      // Predicated region
      $region49: #{attention_forward.1} parent=43 // pred_check
        %p527 = pneg %p287
      $region50: #{attention_forward.1} parent=43 // pred_check_branch
        %529 = sbr.rel (%p527) target = $region52
      $region51: #{attention_forward.1} parent=43 // pred_region
        %v530 = vld [vmem:[#allocation2] sm:$0xff]
        %v531 = vld [vmem:[#allocation2 + $0x8] sm:$0xff]
        %v532 = vld [vmem:[#allocation2 + $0x10] sm:$0xff]
        %v533 = vld [vmem:[#allocation2 + $0x18] sm:$0xff]
        %534 = vadd.xlane.f32.xlu0 %v530
        %v535 = vpop.xlane.xlu0 %534
        %536 = vadd.xlane.f32.xlu0 %v531
        %v537 = vpop.xlane.xlu0 %536
        %538 = vadd.xlane.f32.xlu0 %v532
        %v539 = vpop.xlane.xlu0 %538
        %540 = vadd.xlane.f32.xlu0 %v533
        %v541 = vpop.xlane.xlu0 %540
        %v542 = vmul.f32 %v535, 0.000625
        %v543 = vmul.f32 %v537, 0.000625
        %v544 = vmul.f32 %v539, 0.000625
        %v545 = vmul.f32 %v541, 0.000625
        %v546 = vld [vmem:[%s2] sm:$0xff]
        %v547 = vld [vmem:[%s2 + $0x8] sm:$0xff]
        %v548 = vld [vmem:[%s3] sm:$0x1]
        %v550 = vlaneseq
        %v551 = vshrl.u32 %v550, 7
        %v552 = vsub.s32 0, %v551
        %v553 = vrot.slane %v548, %v552
        %v559 = vlaneseq
        %v560 = vshrl.u32 %v559, 7
        %v561 = vsub.s32 %v296, %v560
        %v562 = vrot.slane %v542, %v561
        %v563 = vadd.s32 %v296, 4294967288
        %v564 = vlaneseq
        %v565 = vshrl.u32 %v564, 7
        %v566 = vsub.s32 %v563, %v565
        %v567 = vrot.slane %v543, %v566
        %vm568 = vcmask 130112
        %v569 = vsel %vm568, %v567, %v562
        %v570 = vlaneseq
        %v571 = vshrl.u32 %v570, 7
        %v572 = vsub.s32 %v296, %v571
        %v573 = vrot.slane %v544, %v572
        %v574 = vlaneseq
        %v575 = vshrl.u32 %v574, 7
        %v576 = vsub.s32 %v563, %v575
        %v577 = vrot.slane %v545, %v576
        %v578 = vsel %vm568, %v577, %v573
        %vm579 = vcmask 1041409
        %v580 = vsel %vm579, %v578, %v569
        %vm581 = vcmask 130048
        %v582 = vsel %vm581, %v580, 0
        %584 = vmatprep.subr.mxu0 0.0
        %585 = vmatpush1.msra.mxu0 %v546
        %586 = vmatprep.subr.mxu0 0.0
        %587 = vmatpush1.msra.mxu0 %v547
        %588 = vmatprep.subr.mxu0 0.0
        %589 = vmatpush1.msra.mxu0 0.0
        %590 = vmatprep.subr.mxu0 0.0
        %591 = vmatpush1.msra.mxu0 0.0
        %592 = vmatprep.subr.mxu0 0.0
        %593 = vmatpush1.msra.mxu0 0.0
        %594 = vmatprep.subr.mxu0 0.0
        %595 = vmatpush1.msra.mxu0 0.0
        %596 = vmatprep.subr.mxu0 0.0
        %597 = vmatpush1.msra.mxu0 0.0
        %598 = vmatprep.subr.mxu0 0.0
        %599 = vmatpush1.msra.mxu0 0.0
        %600 = vmatprep.subr.mxu0 0.0
        %601 = vmatpush1.msra.mxu0 0.0
        %602 = vmatprep.subr.mxu0 0.0
        %603 = vmatpush1.msra.mxu0 0.0
        %604 = vmatprep.subr.mxu0 0.0
        %605 = vmatpush1.msra.mxu0 0.0
        %606 = vmatprep.subr.mxu0 0.0
        %607 = vmatpush1.msra.mxu0 0.0
        %608 = vmatprep.subr.mxu0 0.0
        %609 = vmatpush1.msra.mxu0 0.0
        %610 = vmatprep.subr.mxu0 0.0
        %611 = vmatpush1.msra.mxu0 0.0
        %612 = vmatprep.subr.mxu0 0.0
        %613 = vmatpush1.msra.mxu0 0.0
        %614 = vmatprep.subr.mxu0 0.0
        %615 = vmatpush1.msra.mxu0 0.0
        %616 = vmatprep.subr.mxu0 0.0
        %617 = vmatpush1.msra.mxu0 0.0
        %618 = vmatprep.subr.mxu0 0.0
        %619 = vmatpush1.msra.mxu0 0.0
        %620 = vmatprep.subr.mxu0 0.0
        %621 = vmatpush1.msra.mxu0 0.0
        %622 = vmatprep.subr.mxu0 0.0
        %623 = vmatpush1.msra.mxu0 0.0
        %624 = vmatprep.subr.mxu0 0.0
        %625 = vmatpush1.msra.mxu0 0.0
        %626 = vmatprep.subr.mxu0 0.0
        %627 = vmatpush1.msra.mxu0 0.0
        %628 = vmatprep.subr.mxu0 0.0
        %629 = vmatpush1.msra.mxu0 0.0
        %630 = vmatprep.subr.mxu0 0.0
        %631 = vmatpush1.msra.mxu0 0.0
        %632 = vmatprep.subr.mxu0 0.0
        %633 = vmatpush1.msra.mxu0 0.0
        %634 = vmatprep.subr.mxu0 0.0
        %635 = vmatpush1.msra.mxu0 0.0
        %636 = vmatprep.subr.mxu0 0.0
        %637 = vmatpush1.msra.mxu0 0.0
        %638 = vmatprep.subr.mxu0 0.0
        %639 = vmatpush1.msra.mxu0 0.0
        %640 = vmatprep.subr.mxu0 0.0
        %641 = vmatpush1.msra.mxu0 0.0
        %642 = vmatprep.subr.mxu0 0.0
        %643 = vmatpush1.msra.mxu0 0.0
        %644 = vmatprep.subr.mxu0 0.0
        %645 = vmatpush1.msra.mxu0 0.0
        %646 = vmatprep.subr.mxu0 0.0
        %647 = vmatpush1.msra.mxu0 0.0
        %648 = vmatprep.mubr.f32.mxu0 0.0
        %649 = vmatmul.mubr.f32.gmra.mrb[0].mxu0 %v582
        %v650 = vpop.f32.mrb[0].mxu0
        %v651 = vadd.f32 %v553, %v650
        %v652 = vpop.f32.mrb[0].mxu0
        %653 = vdwg.mxu0
        %v654 = vmax.f32 %v651, 0.0
        %s655 = sld [smem:[#allocation3]]
        %v656 = vstv %s655
        %v657 = vrcp.pop %v656
        %s658 = vtos %v657
        %v659 = vld [vmem:[%s4] sm:$0xff]
        %v660 = vld [vmem:[%s4 + $0x8] sm:$0xff]
        %v661 = vld [vmem:[%s4 + $0x10] sm:$0xff]
        %v662 = vld [vmem:[%s4 + $0x18] sm:$0xff]
        %v663 = vld [vmem:[%s4 + $0x20] sm:$0xff]
        %v664 = vld [vmem:[%s4 + $0x28] sm:$0xff]
        %v665 = vld [vmem:[%s4 + $0x30] sm:$0xff]
        %v666 = vld [vmem:[%s4 + $0x38] sm:$0xff]
        %v667 = vld [vmem:[%s4 + $0x40] sm:$0xff]
        %v668 = vld [vmem:[%s4 + $0x48] sm:$0xff]
        %v669 = vld [vmem:[%s4 + $0x50] sm:$0xff]
        %v670 = vld [vmem:[%s4 + $0x58] sm:$0xff]
        %v671 = vld [vmem:[%s4 + $0x60] sm:$0xff]
        %v672 = vld [vmem:[%s4 + $0x68] sm:$0xff]
        %v673 = vld [vmem:[%s4 + $0x70] sm:$0xff]
        %v674 = vld [vmem:[%s4 + $0x78] sm:$0xff]
        %v675 = vld [vmem:[%s4 + $0x80] sm:$0xff]
        %v676 = vld [vmem:[%s4 + $0x88] sm:$0xff]
        %v677 = vld [vmem:[%s4 + $0x90] sm:$0xff]
        %v678 = vld [vmem:[%s4 + $0x98] sm:$0xff]
        %v679 = vld [vmem:[%s4 + $0xa0] sm:$0xff]
        %v680 = vld [vmem:[%s4 + $0xa8] sm:$0xff]
        %v681 = vld [vmem:[%s4 + $0xb0] sm:$0xff]
        %v682 = vld [vmem:[%s4 + $0xb8] sm:$0xff]
        %v683 = vld [vmem:[%s4 + $0xc0] sm:$0xff]
        %v684 = vld [vmem:[%s4 + $0xc8] sm:$0xff]
        %v685 = vld [vmem:[%s4 + $0xd0] sm:$0xff]
        %v686 = vld [vmem:[%s4 + $0xd8] sm:$0xff]
        %v687 = vld [vmem:[%s4 + $0xe0] sm:$0xff]
        %v688 = vld [vmem:[%s4 + $0xe8] sm:$0xff]
        %v689 = vld [vmem:[%s4 + $0xf0] sm:$0xff]
        %v690 = vld [vmem:[%s4 + $0xf8] sm:$0xff]
        %v691 = vld [vmem:[%s4 + $0x100] sm:$0xff]
        %v692 = vld [vmem:[%s4 + $0x108] sm:$0xff]
        %v693 = vld [vmem:[%s4 + $0x110] sm:$0xff]
        %v694 = vld [vmem:[%s4 + $0x118] sm:$0xff]
        %v695 = vld [vmem:[%s4 + $0x120] sm:$0xff]
        %v696 = vld [vmem:[%s4 + $0x128] sm:$0xff]
        %v697 = vld [vmem:[%s4 + $0x130] sm:$0xff]
        %v698 = vld [vmem:[%s4 + $0x138] sm:$0xff]
        %v699 = vld [vmem:[%s4 + $0x140] sm:$0xff]
        %v700 = vld [vmem:[%s4 + $0x148] sm:$0xff]
        %v701 = vld [vmem:[%s4 + $0x150] sm:$0xff]
        %v702 = vld [vmem:[%s4 + $0x158] sm:$0xff]
        %v703 = vld [vmem:[%s4 + $0x160] sm:$0xff]
        %v704 = vld [vmem:[%s4 + $0x168] sm:$0xff]
        %v705 = vld [vmem:[%s4 + $0x170] sm:$0xff]
        %v706 = vld [vmem:[%s4 + $0x178] sm:$0xff]
        %v707 = vld [vmem:[%s5] sm:$0x7]
        %v709 = vlaneseq
        %v710 = vshrl.u32 %v709, 7
        %v711 = vsub.s32 0, %v710
        %v712 = vrot.slane %v707, %v711
        %v713 = vlaneseq
        %v714 = vshrl.u32 %v713, 7
        %v715 = vsub.s32 1, %v714
        %v716 = vrot.slane %v707, %v715
        %v717 = vlaneseq
        %v718 = vshrl.u32 %v717, 7
        %v719 = vsub.s32 2, %v718
        %v720 = vrot.slane %v707, %v719
        %724 = vmatprep.subr.mxu0 %v660
        %725 = vmatpush1.msra.mxu0 %v659
        %726 = vmatprep.subr.mxu0 %v663
        %727 = vmatpush1.msra.mxu0 %v662
        %728 = vmatprep.subr.mxu0 %v666
        %729 = vmatpush1.msra.mxu0 %v665
        %730 = vmatprep.subr.mxu0 %v669
        %731 = vmatpush1.msra.mxu0 %v668
        %732 = vmatprep.subr.mxu0 %v672
        %733 = vmatpush1.msra.mxu0 %v671
        %734 = vmatprep.subr.mxu0 %v675
        %735 = vmatpush1.msra.mxu0 %v674
        %736 = vmatprep.subr.mxu0 %v678
        %737 = vmatpush1.msra.mxu0 %v677
        %738 = vmatprep.subr.mxu0 %v681
        %739 = vmatpush1.msra.mxu0 %v680
        %740 = vmatprep.subr.mxu0 %v684
        %741 = vmatpush1.msra.mxu0 %v683
        %742 = vmatprep.subr.mxu0 %v687
        %743 = vmatpush1.msra.mxu0 %v686
        %744 = vmatprep.subr.mxu0 %v690
        %745 = vmatpush1.msra.mxu0 %v689
        %746 = vmatprep.subr.mxu0 %v693
        %747 = vmatpush1.msra.mxu0 %v692
        %748 = vmatprep.subr.mxu0 %v696
        %749 = vmatpush1.msra.mxu0 %v695
        %750 = vmatprep.subr.mxu0 %v699
        %751 = vmatpush1.msra.mxu0 %v698
        %752 = vmatprep.subr.mxu0 %v702
        %753 = vmatpush1.msra.mxu0 %v701
        %754 = vmatprep.subr.mxu0 %v705
        %755 = vmatpush1.msra.mxu0 %v704
        %756 = vmatprep.subr.mxu0 0.0
        %757 = vmatpush1.msra.mxu0 0.0
        %758 = vmatprep.subr.mxu0 0.0
        %759 = vmatpush1.msra.mxu0 0.0
        %760 = vmatprep.subr.mxu0 0.0
        %761 = vmatpush1.msra.mxu0 0.0
        %762 = vmatprep.subr.mxu0 0.0
        %763 = vmatpush1.msra.mxu0 0.0
        %764 = vmatprep.subr.mxu0 0.0
        %765 = vmatpush1.msra.mxu0 0.0
        %766 = vmatprep.subr.mxu0 0.0
        %767 = vmatpush1.msra.mxu0 0.0
        %768 = vmatprep.subr.mxu0 0.0
        %769 = vmatpush1.msra.mxu0 0.0
        %770 = vmatprep.subr.mxu0 0.0
        %771 = vmatpush1.msra.mxu0 0.0
        %772 = vmatprep.subr.mxu0 0.0
        %773 = vmatpush1.msra.mxu0 0.0
        %774 = vmatprep.subr.mxu0 0.0
        %775 = vmatpush1.msra.mxu0 0.0
        %776 = vmatprep.subr.mxu0 0.0
        %777 = vmatpush1.msra.mxu0 0.0
        %778 = vmatprep.subr.mxu0 0.0
        %779 = vmatpush1.msra.mxu0 0.0
        %780 = vmatprep.subr.mxu0 0.0
        %781 = vmatpush1.msra.mxu0 0.0
        %782 = vmatprep.subr.mxu0 0.0
        %783 = vmatpush1.msra.mxu0 0.0
        %784 = vmatprep.subr.mxu0 0.0
        %785 = vmatpush1.msra.mxu0 0.0
        %786 = vmatprep.subr.mxu0 0.0
        %787 = vmatpush1.msra.mxu0 0.0
        %788 = vmatprep.mubr.f32.mxu0 0.0
        %789 = vmatmul.mubr.f32.gmra.mrb[0].mxu0 %v654
        %v790 = vpop.f32.mrb[0].mxu0
        %v791 = vadd.f32 %v712, %v790
        %v792 = vpop.f32.mrb[0].mxu0
        %v793 = vadd.f32 %v716, %v792
        %794 = vdwg.mxu0
        %795 = vmatprep.subr.mxu0 0.0
        %796 = vmatpush1.msra.mxu0 %v661
        %797 = vmatprep.subr.mxu0 0.0
        %798 = vmatpush1.msra.mxu0 %v664
        %799 = vmatprep.subr.mxu0 0.0
        %800 = vmatpush1.msra.mxu0 %v667
        %801 = vmatprep.subr.mxu0 0.0
        %802 = vmatpush1.msra.mxu0 %v670
        %803 = vmatprep.subr.mxu0 0.0
        %804 = vmatpush1.msra.mxu0 %v673
        %805 = vmatprep.subr.mxu0 0.0
        %806 = vmatpush1.msra.mxu0 %v676
        %807 = vmatprep.subr.mxu0 0.0
        %808 = vmatpush1.msra.mxu0 %v679
        %809 = vmatprep.subr.mxu0 0.0
        %810 = vmatpush1.msra.mxu0 %v682
        %811 = vmatprep.subr.mxu0 0.0
        %812 = vmatpush1.msra.mxu0 %v685
        %813 = vmatprep.subr.mxu0 0.0
        %814 = vmatpush1.msra.mxu0 %v688
        %815 = vmatprep.subr.mxu0 0.0
        %816 = vmatpush1.msra.mxu0 %v691
        %817 = vmatprep.subr.mxu0 0.0
        %818 = vmatpush1.msra.mxu0 %v694
        %819 = vmatprep.subr.mxu0 0.0
        %820 = vmatpush1.msra.mxu0 %v697
        %821 = vmatprep.subr.mxu0 0.0
        %822 = vmatpush1.msra.mxu0 %v700
        %823 = vmatprep.subr.mxu0 0.0
        %824 = vmatpush1.msra.mxu0 %v703
        %825 = vmatprep.subr.mxu0 0.0
        %826 = vmatpush1.msra.mxu0 %v706
        %827 = vmatprep.subr.mxu0 0.0
        %828 = vmatpush1.msra.mxu0 0.0
        %829 = vmatprep.subr.mxu0 0.0
        %830 = vmatpush1.msra.mxu0 0.0
        %831 = vmatprep.subr.mxu0 0.0
        %832 = vmatpush1.msra.mxu0 0.0
        %833 = vmatprep.subr.mxu0 0.0
        %834 = vmatpush1.msra.mxu0 0.0
        %835 = vmatprep.subr.mxu0 0.0
        %836 = vmatpush1.msra.mxu0 0.0
        %837 = vmatprep.subr.mxu0 0.0
        %838 = vmatpush1.msra.mxu0 0.0
        %839 = vmatprep.subr.mxu0 0.0
        %840 = vmatpush1.msra.mxu0 0.0
        %841 = vmatprep.subr.mxu0 0.0
        %842 = vmatpush1.msra.mxu0 0.0
        %843 = vmatprep.subr.mxu0 0.0
        %844 = vmatpush1.msra.mxu0 0.0
        %845 = vmatprep.subr.mxu0 0.0
        %846 = vmatpush1.msra.mxu0 0.0
        %847 = vmatprep.subr.mxu0 0.0
        %848 = vmatpush1.msra.mxu0 0.0
        %849 = vmatprep.subr.mxu0 0.0
        %850 = vmatpush1.msra.mxu0 0.0
        %851 = vmatprep.subr.mxu0 0.0
        %852 = vmatpush1.msra.mxu0 0.0
        %853 = vmatprep.subr.mxu0 0.0
        %854 = vmatpush1.msra.mxu0 0.0
        %855 = vmatprep.subr.mxu0 0.0
        %856 = vmatpush1.msra.mxu0 0.0
        %857 = vmatprep.subr.mxu0 0.0
        %858 = vmatpush1.msra.mxu0 0.0
        %859 = vmatprep.mubr.f32.mxu0 0.0
        %860 = vmatmul.mubr.f32.gmra.mrb[0].mxu0 %v654
        %v861 = vpop.f32.mrb[0].mxu0
        %v862 = vadd.f32 %v720, %v861
        %v863 = vpop.f32.mrb[0].mxu0
        %864 = vdwg.mxu0
        %v865 = vstv %s658
        %v866 = vmul.f32 %v791, %v865
        %v867 = vmul.f32 %v793, %v865
        %v868 = vmul.f32 %v862, %v865
        %v869 = vxor.u32 %v866, 2147483648
        %v870 = vxor.u32 %v867, 2147483648
        %v871 = vxor.u32 %v868, 2147483648
        %v872 = vmul.f32 %v869, 1.442695
        %v873 = vpow.pop %v872
        %v874 = vmul.f32 %v870, 1.442695
        %v875 = vpow.pop %v874
        %v876 = vmul.f32 %v871, 1.442695
        %v877 = vpow.pop %v876
        %v878 = vadd.f32 %v873, 1.0
        %v879 = vadd.f32 %v875, 1.0
        %v880 = vadd.f32 %v877, 1.0
        %v881 = vrcp.pop %v878
        %v882 = vmul.f32 1.0, %v881
        %v883 = vrcp.pop %v879
        %v884 = vmul.f32 1.0, %v883
        %v885 = vrcp.pop %v880
        %v886 = vmul.f32 1.0, %v885
        %v887 = vadd.s32 %v296, 128
        %v888 = vadd.s32 %v296, 256
        %vm889 = vcmp.ge.s32.totalorder %v296, 265
        %vm890 = vcmp.ge.s32.totalorder %v887, 265
        %vm891 = vcmp.ge.s32.totalorder %v888, 265
        %vm892 = vcmp.lt.s32.totalorder %v296, 269
        %vm893 = vcmp.lt.s32.totalorder %v887, 269
        %vm894 = vcmp.lt.s32.totalorder %v888, 269
        %vm895 = vmand %vm889, %vm892
        %vm896 = vmand %vm890, %vm893
        %vm897 = vmand %vm891, %vm894
        %v898 = vsel %vm895, %v866, -1e+30
        %v899 = vsel %vm896, %v867, -1e+30
        %v900 = vsel %vm897, %v868, -1e+30
        %vm901 = vcmask 1041408
        %v902 = vsel %vm901, %v898, -inf
        %v903 = vsel %vm901, %v899, -inf
        %v904 = vsel %vm901, %v900, -inf
        %v905 = vmax.f32 %v902, %v903
        %v906 = vmax.f32 %v905, %v904
        %907 = vmax.xlane.f32.xlu0 %v906
        %v908 = vpop.xlane.xlu0 %907
        %v909 = vsub.f32 %v898, %v908
        %v910 = vsub.f32 %v899, %v908
        %v911 = vsub.f32 %v900, %v908
        %v912 = vmul.f32 %v909, 1.442695
        %v913 = vpow.pop %v912
        %v914 = vmul.f32 %v910, 1.442695
        %v915 = vpow.pop %v914
        %v916 = vmul.f32 %v911, 1.442695
        %v917 = vpow.pop %v916
        %v918 = vsel %vm901, %v913, 0.0
        %v919 = vsel %vm901, %v915, 0.0
        %v920 = vadd.f32 %v918, %v919
        %v921 = vsel %vm901, %v917, 0.0
        %v922 = vadd.f32 %v920, %v921
        %923 = vadd.xlane.f32.xlu0 %v922
        %v924 = vpop.xlane.xlu0 %923
        %v925 = vrcp.pop %v924
        %v926 = vmul.f32 %v913, %v925
        %v927 = vmul.f32 %v915, %v925
        %v928 = vmul.f32 %v917, %v925
        %v929 = vsel %vm895, %v926, %v882
        %v930 = vsel %vm896, %v927, %v884
        %v931 = vsel %vm897, %v928, %v886
        %v935 = vcombine.low %v929, %v930
        %v937 = vunpack.c.l.s4 1966171168
        %v938 = vunpack.c.0.s8 %v937
        %v939 = vlaneseq
        %v940 = vshrl.u32 %v939, 7
        %v941 = vsub.s32 %v938, %v940
        %v942 = vrot.slane %v935, %v941
        %v944 = vunpack.c.l.s4 1966171168
        %v945 = vunpack.c.0.s8 %v944
        %v946 = vlaneseq
        %v947 = vshrl.u32 %v946, 7
        %v948 = vsub.s32 %v945, %v947
        %v949 = vrot.slane %v931, %v948
        %v950 = vcombine.low %v942, %v949
        %v951 = vcombine.high %v942, %v949
        %v953 = vunpack.c.l.s4 1966171168
        %v954 = vunpack.c.0.s8 %v953
        %v955 = vlaneseq
        %v956 = vshrl.u32 %v955, 7
        %v957 = vsub.s32 %v954, %v956
        %v958 = vrot.slane %v950, %v957
        %v960 = vunpack.c.l.s4 1966171168
        %v961 = vunpack.c.0.s8 %v960
        %v962 = vlaneseq
        %v963 = vshrl.u32 %v962, 7
        %v964 = vsub.s32 %v961, %v963
        %v965 = vrot.slane %v951, %v964
        %v968 = vlaneseq
        %vm969 = vcmp.ge.s32.totalorder %v968, 0
        %vm970 = vcmp.lt.s32.totalorder %v968, 384
        %vm971 = vmand %vm969, %vm970
        %972 = vst.msk [vmem:[%s285] sm:$0x7] %vm971, %v958
        %973 = vst.msk [vmem:[%s285 + $0x3] sm:$0x7] %vm971, %v965
      $region52: #{attention_forward.1} parent=43 // pred_fallthru
        _
      %s974 = smul.u32 2, %s22
      %p975 = scmp.lt.s32.totalorder %s974, 3
      %s976 = scalar_select %p975, %s974, 3
      %s977 = smul.addr %s976, 3
      %s978 = scalar_lea.vmem %s6, %s977
      // Predicated region
      $region53: #{attention_forward.1} parent=43 // pred_check
        %p979 = pneg %p181
      $region54: #{attention_forward.1} parent=43 // pred_check_branch
        %981 = sbr.rel (%p979) target = $region56
      $region55: #{attention_forward.1} parent=43 // pred_region
        %s982 = smul.u32 2, %s22
      $region56: #{attention_forward.1} parent=43 // pred_fallthru
        _
    $region44: #{attention_forward.1} parent=5 // pred_fallthru
      _
    %p983 = scmp.le.s32.totalorder 2, %s13
    // Predicated region
    $region57: #{attention_forward.1} parent=5 // pred_check
      %p984 = pneg %p983
    $region58: #{attention_forward.1} parent=5 // pred_check_branch
      %986 = sbr.rel (%p984) target = $region60
    $region59: #{attention_forward.1} parent=5 // pred_region
      %s987 = ssub.s32 %s13, 2
      // Predicated region
      $region61: #{attention_forward.1} parent=59 // pred_check
        %p988 = pneg %p187
      $region62: #{attention_forward.1} parent=59 // pred_check_branch
        %990 = sbr.rel (%p988) target = $region64
      $region63: #{attention_forward.1} parent=59 // pred_region
        %s991 = smul.u32 2, %s24
        %p992 = scmp.lt.s32.totalorder %s991, 3
        %s993 = scalar_select %p992, %s991, 3
        %s994 = smul.addr %s993, 3
        %s995 = scalar_lea.vmem %s6, %s994
      $region64: #{attention_forward.1} parent=59 // pred_fallthru
        _
    $region60: #{attention_forward.1} parent=5 // pred_fallthru
      _
  $region6: #{attention_forward.1} parent=0 // loop_footer
    %s17 = sadd.s32 1, %s13
  $region7: #{attention_forward.1} parent=0 // loop_footer_branch
    %12 = sbr.rel target = $region3
  $region8: #{attention_forward.1} parent=0 // loop_exit
    _

</llo_original>
